<compile_context>
chip_gen: v7x
topology: tpu7x:2x2x1
jax: 0.10.0
libtpu: 0.0.40
codegen_flags: <defaults>
</compile_context>

<pallas_src>
import jax
import jax.numpy as jnp
from jax.experimental import pallas as pl
from jax.experimental.pallas import tpu as pltpu

EPS = 1e-5            # BatchNorm1d default eps
N_LAYERS = 4
C = 32                # channels of every conv layer
LIN_IN, LIN_OUT = 32, 8


def make_fused_forward(l_in):
    """Build the fused single-launch forward for (static) input length `l_in`."""
    # conv output lengths for k=3, s=2, p=1 with even input length: L_out = L // 2
    lens, L = [], l_in
    for _ in range(N_LAYERS):
        assert L % 2 == 0, (
            "roll-based left-tap construction needs an even length at every layer")
        L = L // 2
        lens.append(L)
    assert lens[-1] == LIN_IN, (
        f"input length {l_in} gives final length {lens[-1]}, Linear expects {LIN_IN}")
    l1, l2, l3, l4 = lens

    def kernel(x_ref, w1_ref, wc_ref, gam_ref, bet_ref, wlin_ref, blin_ref,
               out_ref, p1_ref, p2_ref, p3_ref):

        def taps(pref, l_out):
            # output position l of a k=3/s=2/p=1 conv reads UNPADDED rows
            # 2l-1, 2l, 2l+1 (row -1 is the left zero-pad; the right pad is never
            # read because the layer input length is even).
            t1 = pref[pl.ds(0, l_out, stride=2), :]        # rows 2l
            t2 = pref[pl.ds(1, l_out, stride=2), :]        # rows 2l+1
            rolled = pltpu.roll(t2, shift=1, axis=0)       # rows 2l-1 (row 0 wraps)
            row = jax.lax.broadcasted_iota(jnp.int32, t2.shape, 0)
            t0 = jnp.where(row == 0, 0.0, rolled)          # zero the left-pad row
            return jnp.concatenate([t0, t1, t2], axis=1)   # (l_out, 3*C_in)

        def bn_relu(y, i):
            # train-mode BatchNorm1d over (N=1, L) = axis 0 here, biased variance,
            # one-pass stats (E[y^2] - mean^2, clamped), folded into an affine; ReLU.
            mean = jnp.mean(y, axis=0, keepdims=True)                 # (1, C)
            mean_sq = jnp.mean(y * y, axis=0, keepdims=True)          # (1, C)
            var = jnp.maximum(mean_sq - mean * mean, 0.0)             # (1, C)
            scale = gam_ref[i:i + 1, :] * jax.lax.rsqrt(var + EPS)    # (1, C)
            bias = bet_ref[i:i + 1, :] - scale * mean                 # (1, C)
            return jnp.maximum(y * scale + bias, 0.0)

        # layer 1: (l_in, 1) raw input -> (l1, 32)
        a1 = bn_relu(jnp.dot(taps(x_ref, l1), w1_ref[...],
                             preferred_element_type=jnp.float32), 0)
        p1_ref[...] = a1
        # layer 2: (l1, 32) -> (l2, 32)
        a2 = bn_relu(jnp.dot(taps(p1_ref, l2), wc_ref[0],
                             preferred_element_type=jnp.float32), 1)
        p2_ref[...] = a2
        # layer 3
        a3 = bn_relu(jnp.dot(taps(p2_ref, l3), wc_ref[1],
                             preferred_element_type=jnp.float32), 2)
        p3_ref[...] = a3
        # layer 4 (kept as a value; feeds the Linear directly)
        a4 = bn_relu(jnp.dot(taps(p3_ref, l4), wc_ref[2],
                             preferred_element_type=jnp.float32), 3)

        # fused final Linear along the length axis, computed transposed:
        #   out_T[j, c] = sum_l Wlin[j, l] * a4[l, c] + b[j]
        out_ref[...] = (jnp.dot(wlin_ref[...], a4,
                                preferred_element_type=jnp.float32)
                        + blin_ref[...])

    call = pl.pallas_call(
        kernel,
        out_shape=jax.ShapeDtypeStruct((LIN_OUT, C), jnp.float32),
        scratch_shapes=[
            pltpu.VMEM((l1, C), jnp.float32),   # activation of layer 1
            pltpu.VMEM((l2, C), jnp.float32),   # activation of layer 2
            pltpu.VMEM((l3, C), jnp.float32),   # activation of layer 3
        ],
    )

    def forward(x, kp):
        """x: (1, 1, l_in) -> (1, 32, 8), matching the PyTorch module's forward."""
        x_col = x.reshape(l_in, 1).astype(jnp.float32)   # no host-side padding op
        out_t = call(x_col, kp["w1"], kp["wc"], kp["gam"], kp["bet"],
                     kp["wlin"], kp["blin"])             # (8, 32)
        return jnp.transpose(out_t)[None]                # (1, 32, 8)
        # TODO(synk): BatchNorm running-stats (momentum=0.1) side effect is not
        # modeled; it does not affect the training-mode forward output.

    return forward


def prepare_params(params):
    """One-time repack of PyTorch-layout params into kernel-ready operands."""
    return {
        # layer 1 (C_in=1): (3, 32) with [tap, c_out]
        "w1": jnp.transpose(params["w0"], (2, 1, 0)).reshape(3, C).astype(jnp.float32),
        # layers 2-4: (3, 96, 32) with rows ordered [tap*C_in + c_in]
        "wc": jnp.stack([
            jnp.transpose(params[f"w{i}"], (2, 1, 0)).reshape(3 * C, C)
            for i in range(1, 4)]).astype(jnp.float32),
        "gam": jnp.stack([params[f"gamma{i}"] for i in range(4)]).astype(jnp.float32),
        "bet": jnp.stack([params[f"beta{i}"] for i in range(4)]).astype(jnp.float32),
        "wlin": params["wlin"].astype(jnp.float32),                      # (8, 32)
        "blin": params["blin"].reshape(LIN_OUT, 1).astype(jnp.float32),  # (8, 1)
    }


def init_params(key):
    keys = jax.random.split(key, 14)
    params = {}
    c_in = 1
    for i in range(4):
        fan_in = c_in * 3
        params[f"w{i}"] = (jax.random.normal(keys[i], (C, c_in, 3), jnp.float32)
                           / jnp.sqrt(float(fan_in)))
        params[f"gamma{i}"] = 1.0 + 0.1 * jax.random.normal(keys[4 + i], (C,), jnp.float32)
        params[f"beta{i}"] = 0.1 * jax.random.normal(keys[8 + i], (C,), jnp.float32)
        c_in = C
    params["wlin"] = jax.random.normal(keys[12], (LIN_OUT, C), jnp.float32) / jnp.sqrt(float(C))
    params["blin"] = 0.1 * jax.random.normal(keys[13], (LIN_OUT,), jnp.float32)
    return params


def reference_forward(x, params):
    """Pure-JAX reference (independent formulation, (C, L) layout)."""
    a = x[0].astype(jnp.float32)                      # (C_in, L)
    for i in range(4):
        w = params[f"w{i}"]                           # (C_out, C_in, 3)
        c_in, L = a.shape
        l_out = (L - 1) // 2 + 1
        xp = jnp.pad(a, ((0, 0), (1, 1)))
        y = jnp.zeros((w.shape[0], l_out), jnp.float32)
        for t in range(3):
            y = y + jnp.dot(w[:, :, t], xp[:, t:t + 2 * l_out:2])
        mean = jnp.mean(y, axis=1, keepdims=True)
        var = jnp.mean(jnp.square(y - mean), axis=1, keepdims=True)
        yh = (y - mean) * jax.lax.rsqrt(var + EPS)
        a = jnp.maximum(params[f"gamma{i}"][:, None] * yh
                        + params[f"beta{i}"][:, None], 0.0)
    return (jnp.dot(a, params["wlin"].T) + params["blin"])[None]   # (1, 32, 8)


if __name__ == "__main__":
    key = jax.random.PRNGKey(0)
    pkey, xkey = jax.random.split(key)
    params = init_params(pkey)
    kparams = prepare_params(params)

    # Input length 512 -> conv lengths 256, 128, 64, 32 -> Linear(32, 8) is valid.
    L_IN = 512
    x = jax.random.normal(xkey, (1, 1, L_IN), jnp.float32)

    forward = jax.jit(make_fused_forward(L_IN))
    out = forward(x, kparams)
    jax.block_until_ready(out)
    assert out.shape == (1, C, LIN_OUT), out.shape

    ref = reference_forward(x, params)
    max_err = float(jnp.max(jnp.abs(out - ref)))
    assert jnp.allclose(out, ref, atol=2e-3, rtol=2e-3), max_err

    print("KERNEL_OK")
</pallas_src>

<mosaic_0001>
module attributes {stable_mosaic.version = 11 : i64} {
  func.func @kernel(%arg0: memref<512x1xf32, #tpu.memory_space<vmem>>, %arg1: memref<3x32xf32, #tpu.memory_space<vmem>>, %arg2: memref<3x96x32xf32, #tpu.memory_space<vmem>>, %arg3: memref<4x32xf32, #tpu.memory_space<vmem>>, %arg4: memref<4x32xf32, #tpu.memory_space<vmem>>, %arg5: memref<8x32xf32, #tpu.memory_space<vmem>>, %arg6: memref<8x1xf32, #tpu.memory_space<vmem>>, %arg7: memref<8x32xf32, #tpu.memory_space<vmem>>, %arg8: memref<256x32xf32, #tpu.memory_space<vmem>>, %arg9: memref<128x32xf32, #tpu.memory_space<vmem>>, %arg10: memref<64x32xf32, #tpu.memory_space<vmem>>) attributes {dimension_semantics = [], scalar_prefetch = 0 : i64, scratch_operands = 3 : i64, tpu.core_type = #tpu.core_type<tc>} {
    %c0 = arith.constant 0 : index
    %c0_0 = arith.constant 0 : index
    %0 = tpu.strided_load %arg0[%c0, %c0_0] {strides = array<i32: 2, 1>} : memref<512x1xf32, #tpu.memory_space<vmem>>, vector<256x1xf32>
    %c1 = arith.constant 1 : index
    %c0_1 = arith.constant 0 : index
    %1 = tpu.strided_load %arg0[%c1, %c0_1] {strides = array<i32: 2, 1>} : memref<512x1xf32, #tpu.memory_space<vmem>>, vector<256x1xf32>
    %c1_i32 = arith.constant 1 : i32
    %2 = tpu.dynamic_rotate %1 by %c1_i32 dim 0 : vector<256x1xf32>, i32 -> vector<256x1xf32>
    %3 = tpu.iota {dimensions = array<i32: 0>} : vector<256x1xi32>
    %c0_i32 = arith.constant 0 : i32
    %4 = vector.broadcast %c0_i32 : i32 to vector<256x1xi32>
    %5 = arith.cmpi eq, %3, %4 : vector<256x1xi32>
    %cst = arith.constant 0.000000e+00 : f32
    %6 = vector.broadcast %cst : f32 to vector<256x1xf32>
    %7 = arith.select %5, %6, %2 : vector<256x1xi1>, vector<256x1xf32>
    %8 = tpu.concatenate %7, %0, %1 in 1 : vector<256x1xf32>, vector<256x1xf32>, vector<256x1xf32> -> vector<256x3xf32>
    %c0_2 = arith.constant 0 : index
    %c0_3 = arith.constant 0 : index
    %9 = vector.load %arg1[%c0_2, %c0_3] : memref<3x32xf32, #tpu.memory_space<vmem>>, vector<3x32xf32>
    %cst_4 = arith.constant dense<0.000000e+00> : vector<256x32xf32>
    %10 = tpu.matmul %8, %9, %cst_4 {dimension_numbers = #tpu.dot_dimension_numbers<[1], [0], [0], [1], [0, 0, 1, 1], [], []>} : vector<256x3xf32>, vector<3x32xf32>, vector<256x32xf32> -> vector<256x32xf32>
    %cst_5 = arith.constant dense<0.000000e+00> : vector<32xf32>
    %11 = vector.multi_reduction <add>, %10, %cst_5 [0] : vector<256x32xf32> to vector<32xf32>
    %12 = vector.shape_cast %11 : vector<32xf32> to vector<1x32xf32>
    %cst_6 = arith.constant 2.560000e+02 : f32
    %13 = vector.broadcast %cst_6 : f32 to vector<1x32xf32>
    %14 = arith.divf %12, %13 : vector<1x32xf32>
    %15 = arith.mulf %10, %10 : vector<256x32xf32>
    %cst_7 = arith.constant dense<0.000000e+00> : vector<32xf32>
    %16 = vector.multi_reduction <add>, %15, %cst_7 [0] : vector<256x32xf32> to vector<32xf32>
    %17 = vector.shape_cast %16 : vector<32xf32> to vector<1x32xf32>
    %cst_8 = arith.constant 2.560000e+02 : f32
    %18 = vector.broadcast %cst_8 : f32 to vector<1x32xf32>
    %19 = arith.divf %17, %18 : vector<1x32xf32>
    %20 = arith.mulf %14, %14 : vector<1x32xf32>
    %21 = arith.subf %19, %20 : vector<1x32xf32>
    %cst_9 = arith.constant 0.000000e+00 : f32
    %22 = vector.broadcast %cst_9 : f32 to vector<1x32xf32>
    %23 = arith.maximumf %21, %22 : vector<1x32xf32>
    %c0_10 = arith.constant 0 : index
    %c0_11 = arith.constant 0 : index
    %24 = vector.load %arg3[%c0_10, %c0_11] : memref<4x32xf32, #tpu.memory_space<vmem>>, vector<1x32xf32>
    %cst_12 = arith.constant 9.99999974E-6 : f32
    %25 = vector.broadcast %cst_12 : f32 to vector<1x32xf32>
    %26 = arith.addf %23, %25 : vector<1x32xf32>
    %27 = math.rsqrt %26 : vector<1x32xf32>
    %28 = arith.mulf %24, %27 : vector<1x32xf32>
    %c0_13 = arith.constant 0 : index
    %c0_14 = arith.constant 0 : index
    %29 = vector.load %arg4[%c0_13, %c0_14] : memref<4x32xf32, #tpu.memory_space<vmem>>, vector<1x32xf32>
    %30 = arith.mulf %28, %14 : vector<1x32xf32>
    %31 = arith.subf %29, %30 : vector<1x32xf32>
    %32 = vector.broadcast %28 : vector<1x32xf32> to vector<256x32xf32>
    %33 = arith.mulf %10, %32 : vector<256x32xf32>
    %34 = vector.broadcast %31 : vector<1x32xf32> to vector<256x32xf32>
    %35 = arith.addf %33, %34 : vector<256x32xf32>
    %cst_15 = arith.constant 0.000000e+00 : f32
    %36 = vector.broadcast %cst_15 : f32 to vector<256x32xf32>
    %37 = arith.maximumf %35, %36 : vector<256x32xf32>
    %c0_16 = arith.constant 0 : index
    %c0_17 = arith.constant 0 : index
    %38 = vector.load %arg8[%c0_16, %c0_17] : memref<256x32xf32, #tpu.memory_space<vmem>>, vector<256x32xf32>
    tpu.vector_store %arg8[%c0_16, %c0_17], %37 {strides = array<i32>} : memref<256x32xf32, #tpu.memory_space<vmem>>, vector<256x32xf32>,
    %c0_18 = arith.constant 0 : index
    %c0_19 = arith.constant 0 : index
    %39 = tpu.strided_load %arg8[%c0_18, %c0_19] {strides = array<i32: 2, 1>} : memref<256x32xf32, #tpu.memory_space<vmem>>, vector<128x32xf32>
    %c1_20 = arith.constant 1 : index
    %c0_21 = arith.constant 0 : index
    %40 = tpu.strided_load %arg8[%c1_20, %c0_21] {strides = array<i32: 2, 1>} : memref<256x32xf32, #tpu.memory_space<vmem>>, vector<128x32xf32>
    %c1_i32_22 = arith.constant 1 : i32
    %41 = tpu.dynamic_rotate %40 by %c1_i32_22 dim 0 : vector<128x32xf32>, i32 -> vector<128x32xf32>
    %42 = tpu.iota {dimensions = array<i32: 0>} : vector<128x32xi32>
    %c0_i32_23 = arith.constant 0 : i32
    %43 = vector.broadcast %c0_i32_23 : i32 to vector<128x32xi32>
    %44 = arith.cmpi eq, %42, %43 : vector<128x32xi32>
    %cst_24 = arith.constant 0.000000e+00 : f32
    %45 = vector.broadcast %cst_24 : f32 to vector<128x32xf32>
    %46 = arith.select %44, %45, %41 : vector<128x32xi1>, vector<128x32xf32>
    %47 = tpu.concatenate %46, %39, %40 in 1 : vector<128x32xf32>, vector<128x32xf32>, vector<128x32xf32> -> vector<128x96xf32>
    %c0_25 = arith.constant 0 : index
    %c0_26 = arith.constant 0 : index
    %c0_27 = arith.constant 0 : index
    %48 = vector.load %arg2[%c0_25, %c0_26, %c0_27] : memref<3x96x32xf32, #tpu.memory_space<vmem>>, vector<1x96x32xf32>
    %49 = vector.shape_cast %48 : vector<1x96x32xf32> to vector<96x32xf32>
    %cst_28 = arith.constant dense<0.000000e+00> : vector<128x32xf32>
    %50 = tpu.matmul %47, %49, %cst_28 {dimension_numbers = #tpu.dot_dimension_numbers<[1], [0], [0], [1], [0, 0, 1, 1], [], []>} : vector<128x96xf32>, vector<96x32xf32>, vector<128x32xf32> -> vector<128x32xf32>
    %cst_29 = arith.constant dense<0.000000e+00> : vector<32xf32>
    %51 = vector.multi_reduction <add>, %50, %cst_29 [0] : vector<128x32xf32> to vector<32xf32>
    %52 = vector.shape_cast %51 : vector<32xf32> to vector<1x32xf32>
    %cst_30 = arith.constant 1.280000e+02 : f32
    %53 = vector.broadcast %cst_30 : f32 to vector<1x32xf32>
    %54 = arith.divf %52, %53 : vector<1x32xf32>
    %55 = arith.mulf %50, %50 : vector<128x32xf32>
    %cst_31 = arith.constant dense<0.000000e+00> : vector<32xf32>
    %56 = vector.multi_reduction <add>, %55, %cst_31 [0] : vector<128x32xf32> to vector<32xf32>
    %57 = vector.shape_cast %56 : vector<32xf32> to vector<1x32xf32>
    %cst_32 = arith.constant 1.280000e+02 : f32
    %58 = vector.broadcast %cst_32 : f32 to vector<1x32xf32>
    %59 = arith.divf %57, %58 : vector<1x32xf32>
    %60 = arith.mulf %54, %54 : vector<1x32xf32>
    %61 = arith.subf %59, %60 : vector<1x32xf32>
    %cst_33 = arith.constant 0.000000e+00 : f32
    %62 = vector.broadcast %cst_33 : f32 to vector<1x32xf32>
    %63 = arith.maximumf %61, %62 : vector<1x32xf32>
    %c1_34 = arith.constant 1 : index
    %c0_35 = arith.constant 0 : index
    %64 = vector.load %arg3[%c1_34, %c0_35] : memref<4x32xf32, #tpu.memory_space<vmem>>, vector<1x32xf32>
    %cst_36 = arith.constant 9.99999974E-6 : f32
    %65 = vector.broadcast %cst_36 : f32 to vector<1x32xf32>
    %66 = arith.addf %63, %65 : vector<1x32xf32>
    %67 = math.rsqrt %66 : vector<1x32xf32>
    %68 = arith.mulf %64, %67 : vector<1x32xf32>
    %c1_37 = arith.constant 1 : index
    %c0_38 = arith.constant 0 : index
    %69 = vector.load %arg4[%c1_37, %c0_38] : memref<4x32xf32, #tpu.memory_space<vmem>>, vector<1x32xf32>
    %70 = arith.mulf %68, %54 : vector<1x32xf32>
    %71 = arith.subf %69, %70 : vector<1x32xf32>
    %72 = vector.broadcast %68 : vector<1x32xf32> to vector<128x32xf32>
    %73 = arith.mulf %50, %72 : vector<128x32xf32>
    %74 = vector.broadcast %71 : vector<1x32xf32> to vector<128x32xf32>
    %75 = arith.addf %73, %74 : vector<128x32xf32>
    %cst_39 = arith.constant 0.000000e+00 : f32
    %76 = vector.broadcast %cst_39 : f32 to vector<128x32xf32>
    %77 = arith.maximumf %75, %76 : vector<128x32xf32>
    %c0_40 = arith.constant 0 : index
    %c0_41 = arith.constant 0 : index
    %78 = vector.load %arg9[%c0_40, %c0_41] : memref<128x32xf32, #tpu.memory_space<vmem>>, vector<128x32xf32>
    tpu.vector_store %arg9[%c0_40, %c0_41], %77 {strides = array<i32>} : memref<128x32xf32, #tpu.memory_space<vmem>>, vector<128x32xf32>,
    %c0_42 = arith.constant 0 : index
    %c0_43 = arith.constant 0 : index
    %79 = tpu.strided_load %arg9[%c0_42, %c0_43] {strides = array<i32: 2, 1>} : memref<128x32xf32, #tpu.memory_space<vmem>>, vector<64x32xf32>
    %c1_44 = arith.constant 1 : index
    %c0_45 = arith.constant 0 : index
    %80 = tpu.strided_load %arg9[%c1_44, %c0_45] {strides = array<i32: 2, 1>} : memref<128x32xf32, #tpu.memory_space<vmem>>, vector<64x32xf32>
    %c1_i32_46 = arith.constant 1 : i32
    %81 = tpu.dynamic_rotate %80 by %c1_i32_46 dim 0 : vector<64x32xf32>, i32 -> vector<64x32xf32>
    %82 = tpu.iota {dimensions = array<i32: 0>} : vector<64x32xi32>
    %c0_i32_47 = arith.constant 0 : i32
    %83 = vector.broadcast %c0_i32_47 : i32 to vector<64x32xi32>
    %84 = arith.cmpi eq, %82, %83 : vector<64x32xi32>
    %cst_48 = arith.constant 0.000000e+00 : f32
    %85 = vector.broadcast %cst_48 : f32 to vector<64x32xf32>
    %86 = arith.select %84, %85, %81 : vector<64x32xi1>, vector<64x32xf32>
    %87 = tpu.concatenate %86, %79, %80 in 1 : vector<64x32xf32>, vector<64x32xf32>, vector<64x32xf32> -> vector<64x96xf32>
    %c1_49 = arith.constant 1 : index
    %c0_50 = arith.constant 0 : index
    %c0_51 = arith.constant 0 : index
    %88 = vector.load %arg2[%c1_49, %c0_50, %c0_51] : memref<3x96x32xf32, #tpu.memory_space<vmem>>, vector<1x96x32xf32>
    %89 = vector.shape_cast %88 : vector<1x96x32xf32> to vector<96x32xf32>
    %cst_52 = arith.constant dense<0.000000e+00> : vector<64x32xf32>
    %90 = tpu.matmul %87, %89, %cst_52 {dimension_numbers = #tpu.dot_dimension_numbers<[1], [0], [0], [1], [0, 0, 1, 1], [], []>} : vector<64x96xf32>, vector<96x32xf32>, vector<64x32xf32> -> vector<64x32xf32>
    %cst_53 = arith.constant dense<0.000000e+00> : vector<32xf32>
    %91 = vector.multi_reduction <add>, %90, %cst_53 [0] : vector<64x32xf32> to vector<32xf32>
    %92 = vector.shape_cast %91 : vector<32xf32> to vector<1x32xf32>
    %cst_54 = arith.constant 6.400000e+01 : f32
    %93 = vector.broadcast %cst_54 : f32 to vector<1x32xf32>
    %94 = arith.divf %92, %93 : vector<1x32xf32>
    %95 = arith.mulf %90, %90 : vector<64x32xf32>
    %cst_55 = arith.constant dense<0.000000e+00> : vector<32xf32>
    %96 = vector.multi_reduction <add>, %95, %cst_55 [0] : vector<64x32xf32> to vector<32xf32>
    %97 = vector.shape_cast %96 : vector<32xf32> to vector<1x32xf32>
    %cst_56 = arith.constant 6.400000e+01 : f32
    %98 = vector.broadcast %cst_56 : f32 to vector<1x32xf32>
    %99 = arith.divf %97, %98 : vector<1x32xf32>
    %100 = arith.mulf %94, %94 : vector<1x32xf32>
    %101 = arith.subf %99, %100 : vector<1x32xf32>
    %cst_57 = arith.constant 0.000000e+00 : f32
    %102 = vector.broadcast %cst_57 : f32 to vector<1x32xf32>
    %103 = arith.maximumf %101, %102 : vector<1x32xf32>
    %c2 = arith.constant 2 : index
    %c0_58 = arith.constant 0 : index
    %104 = vector.load %arg3[%c2, %c0_58] : memref<4x32xf32, #tpu.memory_space<vmem>>, vector<1x32xf32>
    %cst_59 = arith.constant 9.99999974E-6 : f32
    %105 = vector.broadcast %cst_59 : f32 to vector<1x32xf32>
    %106 = arith.addf %103, %105 : vector<1x32xf32>
    %107 = math.rsqrt %106 : vector<1x32xf32>
    %108 = arith.mulf %104, %107 : vector<1x32xf32>
    %c2_60 = arith.constant 2 : index
    %c0_61 = arith.constant 0 : index
    %109 = vector.load %arg4[%c2_60, %c0_61] : memref<4x32xf32, #tpu.memory_space<vmem>>, vector<1x32xf32>
    %110 = arith.mulf %108, %94 : vector<1x32xf32>
    %111 = arith.subf %109, %110 : vector<1x32xf32>
    %112 = vector.broadcast %108 : vector<1x32xf32> to vector<64x32xf32>
    %113 = arith.mulf %90, %112 : vector<64x32xf32>
    %114 = vector.broadcast %111 : vector<1x32xf32> to vector<64x32xf32>
    %115 = arith.addf %113, %114 : vector<64x32xf32>
    %cst_62 = arith.constant 0.000000e+00 : f32
    %116 = vector.broadcast %cst_62 : f32 to vector<64x32xf32>
    %117 = arith.maximumf %115, %116 : vector<64x32xf32>
    %c0_63 = arith.constant 0 : index
    %c0_64 = arith.constant 0 : index
    %118 = vector.load %arg10[%c0_63, %c0_64] : memref<64x32xf32, #tpu.memory_space<vmem>>, vector<64x32xf32>
    tpu.vector_store %arg10[%c0_63, %c0_64], %117 {strides = array<i32>} : memref<64x32xf32, #tpu.memory_space<vmem>>, vector<64x32xf32>,
    %c0_65 = arith.constant 0 : index
    %c0_66 = arith.constant 0 : index
    %119 = tpu.strided_load %arg10[%c0_65, %c0_66] {strides = array<i32: 2, 1>} : memref<64x32xf32, #tpu.memory_space<vmem>>, vector<32x32xf32>
    %c1_67 = arith.constant 1 : index
    %c0_68 = arith.constant 0 : index
    %120 = tpu.strided_load %arg10[%c1_67, %c0_68] {strides = array<i32: 2, 1>} : memref<64x32xf32, #tpu.memory_space<vmem>>, vector<32x32xf32>
    %c1_i32_69 = arith.constant 1 : i32
    %121 = tpu.dynamic_rotate %120 by %c1_i32_69 dim 0 : vector<32x32xf32>, i32 -> vector<32x32xf32>
    %122 = tpu.iota {dimensions = array<i32: 0>} : vector<32x32xi32>
    %c0_i32_70 = arith.constant 0 : i32
    %123 = vector.broadcast %c0_i32_70 : i32 to vector<32x32xi32>
    %124 = arith.cmpi eq, %122, %123 : vector<32x32xi32>
    %cst_71 = arith.constant 0.000000e+00 : f32
    %125 = vector.broadcast %cst_71 : f32 to vector<32x32xf32>
    %126 = arith.select %124, %125, %121 : vector<32x32xi1>, vector<32x32xf32>
    %127 = tpu.concatenate %126, %119, %120 in 1 : vector<32x32xf32>, vector<32x32xf32>, vector<32x32xf32> -> vector<32x96xf32>
    %c2_72 = arith.constant 2 : index
    %c0_73 = arith.constant 0 : index
    %c0_74 = arith.constant 0 : index
    %128 = vector.load %arg2[%c2_72, %c0_73, %c0_74] : memref<3x96x32xf32, #tpu.memory_space<vmem>>, vector<1x96x32xf32>
    %129 = vector.shape_cast %128 : vector<1x96x32xf32> to vector<96x32xf32>
    %cst_75 = arith.constant dense<0.000000e+00> : vector<32x32xf32>
    %130 = tpu.matmul %127, %129, %cst_75 {dimension_numbers = #tpu.dot_dimension_numbers<[1], [0], [0], [1], [0, 0, 1, 1], [], []>} : vector<32x96xf32>, vector<96x32xf32>, vector<32x32xf32> -> vector<32x32xf32>
    %cst_76 = arith.constant dense<0.000000e+00> : vector<32xf32>
    %131 = vector.multi_reduction <add>, %130, %cst_76 [0] : vector<32x32xf32> to vector<32xf32>
    %132 = vector.shape_cast %131 : vector<32xf32> to vector<1x32xf32>
    %cst_77 = arith.constant 3.200000e+01 : f32
    %133 = vector.broadcast %cst_77 : f32 to vector<1x32xf32>
    %134 = arith.divf %132, %133 : vector<1x32xf32>
    %135 = arith.mulf %130, %130 : vector<32x32xf32>
    %cst_78 = arith.constant dense<0.000000e+00> : vector<32xf32>
    %136 = vector.multi_reduction <add>, %135, %cst_78 [0] : vector<32x32xf32> to vector<32xf32>
    %137 = vector.shape_cast %136 : vector<32xf32> to vector<1x32xf32>
    %cst_79 = arith.constant 3.200000e+01 : f32
    %138 = vector.broadcast %cst_79 : f32 to vector<1x32xf32>
    %139 = arith.divf %137, %138 : vector<1x32xf32>
    %140 = arith.mulf %134, %134 : vector<1x32xf32>
    %141 = arith.subf %139, %140 : vector<1x32xf32>
    %cst_80 = arith.constant 0.000000e+00 : f32
    %142 = vector.broadcast %cst_80 : f32 to vector<1x32xf32>
    %143 = arith.maximumf %141, %142 : vector<1x32xf32>
    %c3 = arith.constant 3 : index
    %c0_81 = arith.constant 0 : index
    %144 = vector.load %arg3[%c3, %c0_81] : memref<4x32xf32, #tpu.memory_space<vmem>>, vector<1x32xf32>
    %cst_82 = arith.constant 9.99999974E-6 : f32
    %145 = vector.broadcast %cst_82 : f32 to vector<1x32xf32>
    %146 = arith.addf %143, %145 : vector<1x32xf32>
    %147 = math.rsqrt %146 : vector<1x32xf32>
    %148 = arith.mulf %144, %147 : vector<1x32xf32>
    %c3_83 = arith.constant 3 : index
    %c0_84 = arith.constant 0 : index
    %149 = vector.load %arg4[%c3_83, %c0_84] : memref<4x32xf32, #tpu.memory_space<vmem>>, vector<1x32xf32>
    %150 = arith.mulf %148, %134 : vector<1x32xf32>
    %151 = arith.subf %149, %150 : vector<1x32xf32>
    %152 = vector.broadcast %148 : vector<1x32xf32> to vector<32x32xf32>
    %153 = arith.mulf %130, %152 : vector<32x32xf32>
    %154 = vector.broadcast %151 : vector<1x32xf32> to vector<32x32xf32>
    %155 = arith.addf %153, %154 : vector<32x32xf32>
    %cst_85 = arith.constant 0.000000e+00 : f32
    %156 = vector.broadcast %cst_85 : f32 to vector<32x32xf32>
    %157 = arith.maximumf %155, %156 : vector<32x32xf32>
    %c0_86 = arith.constant 0 : index
    %c0_87 = arith.constant 0 : index
    %158 = vector.load %arg5[%c0_86, %c0_87] : memref<8x32xf32, #tpu.memory_space<vmem>>, vector<8x32xf32>
    %cst_88 = arith.constant dense<0.000000e+00> : vector<8x32xf32>
    %159 = tpu.matmul %158, %157, %cst_88 {dimension_numbers = #tpu.dot_dimension_numbers<[1], [0], [0], [1], [0, 0, 1, 1], [], []>} : vector<8x32xf32>, vector<32x32xf32>, vector<8x32xf32> -> vector<8x32xf32>
    %c0_89 = arith.constant 0 : index
    %c0_90 = arith.constant 0 : index
    %160 = vector.load %arg6[%c0_89, %c0_90] : memref<8x1xf32, #tpu.memory_space<vmem>>, vector<8x1xf32>
    %161 = vector.broadcast %160 : vector<8x1xf32> to vector<8x32xf32>
    %162 = arith.addf %159, %161 : vector<8x32xf32>
    %c0_91 = arith.constant 0 : index
    %c0_92 = arith.constant 0 : index
    %163 = vector.load %arg7[%c0_91, %c0_92] : memref<8x32xf32, #tpu.memory_space<vmem>>, vector<8x32xf32>
    tpu.vector_store %arg7[%c0_91, %c0_92], %162 {strides = array<i32>} : memref<8x32xf32, #tpu.memory_space<vmem>>, vector<8x32xf32>,
    return
  }
}

</mosaic_0001>

<llo_original>
// kernel: forward.1
$region0: #{forward.1}
  #allocation0 [shape = 'u32[]', space=smem, size = 0x4, offset = 0x4, fixed_abs, tag = 'smem constant byte address 0x4 - core index']
  #allocation1 [shape = 'u32[144,128]{1,0:T(1,128)}', space=vmem, size = 0x12000, scoped, tag = 'internal scratch']
  #allocation2 [shape = 'f32[256,32]{1,0:T(8,128)}', space=vmem, size = 0x20000, scoped, tag = 'scratch operand']
  #allocation3 [shape = 'f32[128,32]{1,0:T(8,128)}', space=vmem, size = 0x10000, scoped, tag = 'scratch operand']
  #allocation4 [shape = 'f32[64,32]{1,0:T(8,128)}', space=vmem, size = 0x8000, scoped, tag = 'scratch operand']
  %s0 = inlined_call_operand.vmem [shape: f32[512,1], index: 0, kind: input, shape index: {}]
  %s1 = inlined_call_operand.vmem [shape: f32[3,32], index: 1, kind: input, shape index: {}]
  %s2 = inlined_call_operand.vmem [shape: f32[3,96,32], index: 2, kind: input, shape index: {}]
  %s3 = inlined_call_operand.vmem [shape: f32[4,32], index: 3, kind: input, shape index: {}]
  %s4 = inlined_call_operand.vmem [shape: f32[4,32], index: 4, kind: input, shape index: {}]
  %s5 = inlined_call_operand.vmem [shape: f32[8,32], index: 5, kind: input, shape index: {}]
  %s6 = inlined_call_operand.vmem [shape: f32[8,1], index: 6, kind: input, shape index: {}]
  %s7 = inlined_call_operand.hbm [shape: f32[8,32], index: 7, kind: output, shape index: {}]
  %s8 = sld [smem:[#allocation0]]
  $region38: #{forward.1} parent=0
    _
  %s10 = ssub.s32 1, %s8
  %s11 = scalar_select 0, %s10, %s8
  $region1: #{forward.1} parent=0
    #allocation5 [shape = 'u8[4096]{0}', space=vmem, size = 0x1000, scoped, tag = 'output window, operand 0, single buffered']
    #allocation6 [shape = 's32[1]{0}', space=sflag, size = 0x4, scoped, tag = 'scoped memory for forward.1']
    %12 = vsyncpa [#allocation6], 0
    // Predicated region
    $region2: #{forward.1} parent=1 // pred_check
      _
    $region3: #{forward.1} parent=1 // pred_check_branch
      %14 = sbr.rel (0) target = $region5
    $region4: #{forward.1} parent=1 // pred_region
      _
    $region5: #{forward.1} parent=1 // pred_fallthru
      _
    // Predicated region
    $region6: #{forward.1} parent=1 // pred_check
      _
    $region7: #{forward.1} parent=1 // pred_check_branch
      %16 = sbr.rel (0) target = $region9
    $region8: #{forward.1} parent=1 // pred_region
      _
    $region9: #{forward.1} parent=1 // pred_fallthru
      _
    // Predicated region
    $region10: #{forward.1} parent=1 // pred_check
      _
    $region11: #{forward.1} parent=1 // pred_check_branch
      %18 = sbr.rel (0) target = $region13
    $region12: #{forward.1} parent=1 // pred_region
      _
    $region13: #{forward.1} parent=1 // pred_fallthru
      _
    // Predicated region
    $region14: #{forward.1} parent=1 // pred_check
      _
    $region15: #{forward.1} parent=1 // pred_check_branch
      %20 = sbr.rel (0) target = $region17
    $region16: #{forward.1} parent=1 // pred_region
      _
    $region17: #{forward.1} parent=1 // pred_fallthru
      _
    // Predicated region
    $region18: #{forward.1} parent=1 // pred_check
      _
    $region19: #{forward.1} parent=1 // pred_check_branch
      %22 = sbr.rel (0) target = $region21
    $region20: #{forward.1} parent=1 // pred_region
      _
    $region21: #{forward.1} parent=1 // pred_fallthru
      _
    // Predicated region
    $region22: #{forward.1} parent=1 // pred_check
      _
    $region23: #{forward.1} parent=1 // pred_check_branch
      %24 = sbr.rel (0) target = $region25
    $region24: #{forward.1} parent=1 // pred_region
      _
    $region25: #{forward.1} parent=1 // pred_fallthru
      _
    // Predicated region
    $region26: #{forward.1} parent=1 // pred_check
      _
    $region27: #{forward.1} parent=1 // pred_check_branch
      %26 = sbr.rel (0) target = $region29
    $region28: #{forward.1} parent=1 // pred_region
      _
    $region29: #{forward.1} parent=1 // pred_fallthru
      _
    %v27 = vld [vmem:[%s0] ss:$2 sm:$0xff]
    %s28 = scalar_lea.vmem %s0, 16
    %v29 = vld [vmem:[%s28] ss:$2 sm:$0xff]
    %s30 = scalar_lea.vmem %s0, 32
    %v31 = vld [vmem:[%s30] ss:$2 sm:$0xff]
    %s32 = scalar_lea.vmem %s0, 48
    %v33 = vld [vmem:[%s32] ss:$2 sm:$0xff]
    %s34 = scalar_lea.vmem %s0, 64
    %v35 = vld [vmem:[%s34] ss:$2 sm:$0xff]
    %s36 = scalar_lea.vmem %s0, 80
    %v37 = vld [vmem:[%s36] ss:$2 sm:$0xff]
    %s38 = scalar_lea.vmem %s0, 96
    %v39 = vld [vmem:[%s38] ss:$2 sm:$0xff]
    %s40 = scalar_lea.vmem %s0, 112
    %v41 = vld [vmem:[%s40] ss:$2 sm:$0xff]
    %s42 = scalar_lea.vmem %s0, 128
    %v43 = vld [vmem:[%s42] ss:$2 sm:$0xff]
    %s44 = scalar_lea.vmem %s0, 144
    %v45 = vld [vmem:[%s44] ss:$2 sm:$0xff]
    %s46 = scalar_lea.vmem %s0, 160
    %v47 = vld [vmem:[%s46] ss:$2 sm:$0xff]
    %s48 = scalar_lea.vmem %s0, 176
    %v49 = vld [vmem:[%s48] ss:$2 sm:$0xff]
    %s50 = scalar_lea.vmem %s0, 192
    %v51 = vld [vmem:[%s50] ss:$2 sm:$0xff]
    %s52 = scalar_lea.vmem %s0, 208
    %v53 = vld [vmem:[%s52] ss:$2 sm:$0xff]
    %s54 = scalar_lea.vmem %s0, 224
    %v55 = vld [vmem:[%s54] ss:$2 sm:$0xff]
    %s56 = scalar_lea.vmem %s0, 240
    %v57 = vld [vmem:[%s56] ss:$2 sm:$0xff]
    %s58 = scalar_lea.vmem %s0, 256
    %v59 = vld [vmem:[%s58] ss:$2 sm:$0xff]
    %s60 = scalar_lea.vmem %s0, 272
    %v61 = vld [vmem:[%s60] ss:$2 sm:$0xff]
    %s62 = scalar_lea.vmem %s0, 288
    %v63 = vld [vmem:[%s62] ss:$2 sm:$0xff]
    %s64 = scalar_lea.vmem %s0, 304
    %v65 = vld [vmem:[%s64] ss:$2 sm:$0xff]
    %s66 = scalar_lea.vmem %s0, 320
    %v67 = vld [vmem:[%s66] ss:$2 sm:$0xff]
    %s68 = scalar_lea.vmem %s0, 336
    %v69 = vld [vmem:[%s68] ss:$2 sm:$0xff]
    %s70 = scalar_lea.vmem %s0, 352
    %v71 = vld [vmem:[%s70] ss:$2 sm:$0xff]
    %s72 = scalar_lea.vmem %s0, 368
    %v73 = vld [vmem:[%s72] ss:$2 sm:$0xff]
    %s74 = scalar_lea.vmem %s0, 384
    %v75 = vld [vmem:[%s74] ss:$2 sm:$0xff]
    %s76 = scalar_lea.vmem %s0, 400
    %v77 = vld [vmem:[%s76] ss:$2 sm:$0xff]
    %s78 = scalar_lea.vmem %s0, 416
    %v79 = vld [vmem:[%s78] ss:$2 sm:$0xff]
    %s80 = scalar_lea.vmem %s0, 432
    %v81 = vld [vmem:[%s80] ss:$2 sm:$0xff]
    %s82 = scalar_lea.vmem %s0, 448
    %v83 = vld [vmem:[%s82] ss:$2 sm:$0xff]
    %s84 = scalar_lea.vmem %s0, 464
    %v85 = vld [vmem:[%s84] ss:$2 sm:$0xff]
    %s86 = scalar_lea.vmem %s0, 480
    %v87 = vld [vmem:[%s86] ss:$2 sm:$0xff]
    %s88 = scalar_lea.vmem %s0, 496
    %v89 = vld [vmem:[%s88] ss:$2 sm:$0xff]
    %s90 = scalar_lea.vmem %s0, 1
    %v91 = vld [vmem:[%s90] ss:$2 sm:$0xff]
    %s92 = scalar_lea.vmem %s0, 17
    %v93 = vld [vmem:[%s92] ss:$2 sm:$0xff]
    %s94 = scalar_lea.vmem %s0, 33
    %v95 = vld [vmem:[%s94] ss:$2 sm:$0xff]
    %s96 = scalar_lea.vmem %s0, 49
    %v97 = vld [vmem:[%s96] ss:$2 sm:$0xff]
    %s98 = scalar_lea.vmem %s0, 65
    %v99 = vld [vmem:[%s98] ss:$2 sm:$0xff]
    %s100 = scalar_lea.vmem %s0, 81
    %v101 = vld [vmem:[%s100] ss:$2 sm:$0xff]
    %s102 = scalar_lea.vmem %s0, 97
    %v103 = vld [vmem:[%s102] ss:$2 sm:$0xff]
    %s104 = scalar_lea.vmem %s0, 113
    %v105 = vld [vmem:[%s104] ss:$2 sm:$0xff]
    %s106 = scalar_lea.vmem %s0, 129
    %v107 = vld [vmem:[%s106] ss:$2 sm:$0xff]
    %s108 = scalar_lea.vmem %s0, 145
    %v109 = vld [vmem:[%s108] ss:$2 sm:$0xff]
    %s110 = scalar_lea.vmem %s0, 161
    %v111 = vld [vmem:[%s110] ss:$2 sm:$0xff]
    %s112 = scalar_lea.vmem %s0, 177
    %v113 = vld [vmem:[%s112] ss:$2 sm:$0xff]
    %s114 = scalar_lea.vmem %s0, 193
    %v115 = vld [vmem:[%s114] ss:$2 sm:$0xff]
    %s116 = scalar_lea.vmem %s0, 209
    %v117 = vld [vmem:[%s116] ss:$2 sm:$0xff]
    %s118 = scalar_lea.vmem %s0, 225
    %v119 = vld [vmem:[%s118] ss:$2 sm:$0xff]
    %s120 = scalar_lea.vmem %s0, 241
    %v121 = vld [vmem:[%s120] ss:$2 sm:$0xff]
    %s122 = scalar_lea.vmem %s0, 257
    %v123 = vld [vmem:[%s122] ss:$2 sm:$0xff]
    %s124 = scalar_lea.vmem %s0, 273
    %v125 = vld [vmem:[%s124] ss:$2 sm:$0xff]
    %s126 = scalar_lea.vmem %s0, 289
    %v127 = vld [vmem:[%s126] ss:$2 sm:$0xff]
    %s128 = scalar_lea.vmem %s0, 305
    %v129 = vld [vmem:[%s128] ss:$2 sm:$0xff]
    %s130 = scalar_lea.vmem %s0, 321
    %v131 = vld [vmem:[%s130] ss:$2 sm:$0xff]
    %s132 = scalar_lea.vmem %s0, 337
    %v133 = vld [vmem:[%s132] ss:$2 sm:$0xff]
    %s134 = scalar_lea.vmem %s0, 353
    %v135 = vld [vmem:[%s134] ss:$2 sm:$0xff]
    %s136 = scalar_lea.vmem %s0, 369
    %v137 = vld [vmem:[%s136] ss:$2 sm:$0xff]
    %s138 = scalar_lea.vmem %s0, 385
    %v139 = vld [vmem:[%s138] ss:$2 sm:$0xff]
    %s140 = scalar_lea.vmem %s0, 401
    %v141 = vld [vmem:[%s140] ss:$2 sm:$0xff]
    %s142 = scalar_lea.vmem %s0, 417
    %v143 = vld [vmem:[%s142] ss:$2 sm:$0xff]
    %s144 = scalar_lea.vmem %s0, 433
    %v145 = vld [vmem:[%s144] ss:$2 sm:$0xff]
    %s146 = scalar_lea.vmem %s0, 449
    %v147 = vld [vmem:[%s146] ss:$2 sm:$0xff]
    %s148 = scalar_lea.vmem %s0, 465
    %v149 = vld [vmem:[%s148] ss:$2 sm:$0xff]
    %s150 = scalar_lea.vmem %s0, 481
    %v151 = vld [vmem:[%s150] ss:$2 sm:$0xff]
    %s152 = scalar_lea.vmem %s0, 497
    %v153 = vld [vmem:[%s152] ss:$2 sm:$0xff]
    %v154 = vrot.slane %v91, 7
    %v155 = vrot.slane %v93, 7
    %v156 = vrot.slane %v95, 7
    %v157 = vrot.slane %v97, 7
    %v158 = vrot.slane %v99, 7
    %v159 = vrot.slane %v101, 7
    %v160 = vrot.slane %v103, 7
    %v161 = vrot.slane %v105, 7
    %v162 = vrot.slane %v107, 7
    %v163 = vrot.slane %v109, 7
    %v164 = vrot.slane %v111, 7
    %v165 = vrot.slane %v113, 7
    %v166 = vrot.slane %v115, 7
    %v167 = vrot.slane %v117, 7
    %v168 = vrot.slane %v119, 7
    %v169 = vrot.slane %v121, 7
    %v170 = vrot.slane %v123, 7
    %v171 = vrot.slane %v125, 7
    %v172 = vrot.slane %v127, 7
    %v173 = vrot.slane %v129, 7
    %v174 = vrot.slane %v131, 7
    %v175 = vrot.slane %v133, 7
    %v176 = vrot.slane %v135, 7
    %v177 = vrot.slane %v137, 7
    %v178 = vrot.slane %v139, 7
    %v179 = vrot.slane %v141, 7
    %v180 = vrot.slane %v143, 7
    %v181 = vrot.slane %v145, 7
    %v182 = vrot.slane %v147, 7
    %v183 = vrot.slane %v149, 7
    %v184 = vrot.slane %v151, 7
    %v185 = vrot.slane %v153, 7
    %v186 = vlaneseq
    %v187 = vshrl.u32 %v186, 7
    %vm188 = vcmp.lt.s32.totalorder %v187, 1
    %v189 = vsel %vm188, %v184, %v185
    %v190 = vsel %vm188, %v183, %v184
    %v191 = vsel %vm188, %v182, %v183
    %v192 = vsel %vm188, %v181, %v182
    %v193 = vsel %vm188, %v180, %v181
    %v194 = vsel %vm188, %v179, %v180
    %v195 = vsel %vm188, %v178, %v179
    %v196 = vsel %vm188, %v177, %v178
    %v197 = vsel %vm188, %v176, %v177
    %v198 = vsel %vm188, %v175, %v176
    %v199 = vsel %vm188, %v174, %v175
    %v200 = vsel %vm188, %v173, %v174
    %v201 = vsel %vm188, %v172, %v173
    %v202 = vsel %vm188, %v171, %v172
    %v203 = vsel %vm188, %v170, %v171
    %v204 = vsel %vm188, %v169, %v170
    %v205 = vsel %vm188, %v168, %v169
    %v206 = vsel %vm188, %v167, %v168
    %v207 = vsel %vm188, %v166, %v167
    %v208 = vsel %vm188, %v165, %v166
    %v209 = vsel %vm188, %v164, %v165
    %v210 = vsel %vm188, %v163, %v164
    %v211 = vsel %vm188, %v162, %v163
    %v212 = vsel %vm188, %v161, %v162
    %v213 = vsel %vm188, %v160, %v161
    %v214 = vsel %vm188, %v159, %v160
    %v215 = vsel %vm188, %v158, %v159
    %v216 = vsel %vm188, %v157, %v158
    %v217 = vsel %vm188, %v156, %v157
    %v218 = vsel %vm188, %v155, %v156
    %v219 = vsel %vm188, %v154, %v155
    %v220 = vsel %vm188, %v185, %v154
    %v221 = vadd.s32 %v187, 8
    %v222 = vadd.s32 %v187, 16
    %v223 = vadd.s32 %v187, 24
    %v224 = vadd.s32 %v187, 32
    %v225 = vadd.s32 %v187, 40
    %v226 = vadd.s32 %v187, 48
    %v227 = vadd.s32 %v187, 56
    %v228 = vadd.s32 %v187, 64
    %v229 = vadd.s32 %v187, 72
    %v230 = vadd.s32 %v187, 80
    %v231 = vadd.s32 %v187, 88
    %v232 = vadd.s32 %v187, 96
    %v233 = vadd.s32 %v187, 104
    %v234 = vadd.s32 %v187, 112
    %v235 = vadd.s32 %v187, 120
    %v236 = vadd.s32 %v187, 128
    %v237 = vadd.s32 %v187, 136
    %v238 = vadd.s32 %v187, 144
    %v239 = vadd.s32 %v187, 152
    %v240 = vadd.s32 %v187, 160
    %v241 = vadd.s32 %v187, 168
    %v242 = vadd.s32 %v187, 176
    %v243 = vadd.s32 %v187, 184
    %v244 = vadd.s32 %v187, 192
    %v245 = vadd.s32 %v187, 200
    %v246 = vadd.s32 %v187, 208
    %v247 = vadd.s32 %v187, 216
    %v248 = vadd.s32 %v187, 224
    %v249 = vadd.s32 %v187, 232
    %v250 = vadd.s32 %v187, 240
    %v251 = vadd.s32 %v187, 248
    %vm252 = vcmp.eq.s32.totalorder %v187, 0
    %vm253 = vcmp.eq.s32.totalorder %v221, 0
    %vm254 = vcmp.eq.s32.totalorder %v222, 0
    %vm255 = vcmp.eq.s32.totalorder %v223, 0
    %vm256 = vcmp.eq.s32.totalorder %v224, 0
    %vm257 = vcmp.eq.s32.totalorder %v225, 0
    %vm258 = vcmp.eq.s32.totalorder %v226, 0
    %vm259 = vcmp.eq.s32.totalorder %v227, 0
    %vm260 = vcmp.eq.s32.totalorder %v228, 0
    %vm261 = vcmp.eq.s32.totalorder %v229, 0
    %vm262 = vcmp.eq.s32.totalorder %v230, 0
    %vm263 = vcmp.eq.s32.totalorder %v231, 0
    %vm264 = vcmp.eq.s32.totalorder %v232, 0
    %vm265 = vcmp.eq.s32.totalorder %v233, 0
    %vm266 = vcmp.eq.s32.totalorder %v234, 0
    %vm267 = vcmp.eq.s32.totalorder %v235, 0
    %vm268 = vcmp.eq.s32.totalorder %v236, 0
    %vm269 = vcmp.eq.s32.totalorder %v237, 0
    %vm270 = vcmp.eq.s32.totalorder %v238, 0
    %vm271 = vcmp.eq.s32.totalorder %v239, 0
    %vm272 = vcmp.eq.s32.totalorder %v240, 0
    %vm273 = vcmp.eq.s32.totalorder %v241, 0
    %vm274 = vcmp.eq.s32.totalorder %v242, 0
    %vm275 = vcmp.eq.s32.totalorder %v243, 0
    %vm276 = vcmp.eq.s32.totalorder %v244, 0
    %vm277 = vcmp.eq.s32.totalorder %v245, 0
    %vm278 = vcmp.eq.s32.totalorder %v246, 0
    %vm279 = vcmp.eq.s32.totalorder %v247, 0
    %vm280 = vcmp.eq.s32.totalorder %v248, 0
    %vm281 = vcmp.eq.s32.totalorder %v249, 0
    %vm282 = vcmp.eq.s32.totalorder %v250, 0
    %vm283 = vcmp.eq.s32.totalorder %v251, 0
    %v284 = vsel %vm252, 0.0, %v220
    %v285 = vsel %vm253, 0.0, %v219
    %v286 = vsel %vm254, 0.0, %v218
    %v287 = vsel %vm255, 0.0, %v217
    %v288 = vsel %vm256, 0.0, %v216
    %v289 = vsel %vm257, 0.0, %v215
    %v290 = vsel %vm258, 0.0, %v214
    %v291 = vsel %vm259, 0.0, %v213
    %v292 = vsel %vm260, 0.0, %v212
    %v293 = vsel %vm261, 0.0, %v211
    %v294 = vsel %vm262, 0.0, %v210
    %v295 = vsel %vm263, 0.0, %v209
    %v296 = vsel %vm264, 0.0, %v208
    %v297 = vsel %vm265, 0.0, %v207
    %v298 = vsel %vm266, 0.0, %v206
    %v299 = vsel %vm267, 0.0, %v205
    %v300 = vsel %vm268, 0.0, %v204
    %v301 = vsel %vm269, 0.0, %v203
    %v302 = vsel %vm270, 0.0, %v202
    %v303 = vsel %vm271, 0.0, %v201
    %v304 = vsel %vm272, 0.0, %v200
    %v305 = vsel %vm273, 0.0, %v199
    %v306 = vsel %vm274, 0.0, %v198
    %v307 = vsel %vm275, 0.0, %v197
    %v308 = vsel %vm276, 0.0, %v196
    %v309 = vsel %vm277, 0.0, %v195
    %v310 = vsel %vm278, 0.0, %v194
    %v311 = vsel %vm279, 0.0, %v193
    %v312 = vsel %vm280, 0.0, %v192
    %v313 = vsel %vm281, 0.0, %v191
    %v314 = vsel %vm282, 0.0, %v190
    %v315 = vsel %vm283, 0.0, %v189
    %348 = vrot.lane.b32.xlu0 %v27, 1
    %v349 = vpop.permute.xlu0 %348
    %350 = vrot.lane.b32.xlu0 %v29, 1
    %v351 = vpop.permute.xlu0 %350
    %352 = vrot.lane.b32.xlu0 %v31, 1
    %v353 = vpop.permute.xlu0 %352
    %354 = vrot.lane.b32.xlu0 %v33, 1
    %v355 = vpop.permute.xlu0 %354
    %356 = vrot.lane.b32.xlu0 %v35, 1
    %v357 = vpop.permute.xlu0 %356
    %358 = vrot.lane.b32.xlu0 %v37, 1
    %v359 = vpop.permute.xlu0 %358
    %360 = vrot.lane.b32.xlu0 %v39, 1
    %v361 = vpop.permute.xlu0 %360
    %362 = vrot.lane.b32.xlu0 %v41, 1
    %v363 = vpop.permute.xlu0 %362
    %364 = vrot.lane.b32.xlu0 %v43, 1
    %v365 = vpop.permute.xlu0 %364
    %366 = vrot.lane.b32.xlu0 %v45, 1
    %v367 = vpop.permute.xlu0 %366
    %368 = vrot.lane.b32.xlu0 %v47, 1
    %v369 = vpop.permute.xlu0 %368
    %370 = vrot.lane.b32.xlu0 %v49, 1
    %v371 = vpop.permute.xlu0 %370
    %372 = vrot.lane.b32.xlu0 %v51, 1
    %v373 = vpop.permute.xlu0 %372
    %374 = vrot.lane.b32.xlu0 %v53, 1
    %v375 = vpop.permute.xlu0 %374
    %376 = vrot.lane.b32.xlu0 %v55, 1
    %v377 = vpop.permute.xlu0 %376
    %378 = vrot.lane.b32.xlu0 %v57, 1
    %v379 = vpop.permute.xlu0 %378
    %380 = vrot.lane.b32.xlu0 %v59, 1
    %v381 = vpop.permute.xlu0 %380
    %382 = vrot.lane.b32.xlu0 %v61, 1
    %v383 = vpop.permute.xlu0 %382
    %384 = vrot.lane.b32.xlu0 %v63, 1
    %v385 = vpop.permute.xlu0 %384
    %386 = vrot.lane.b32.xlu0 %v65, 1
    %v387 = vpop.permute.xlu0 %386
    %388 = vrot.lane.b32.xlu0 %v67, 1
    %v389 = vpop.permute.xlu0 %388
    %390 = vrot.lane.b32.xlu0 %v69, 1
    %v391 = vpop.permute.xlu0 %390
    %392 = vrot.lane.b32.xlu0 %v71, 1
    %v393 = vpop.permute.xlu0 %392
    %394 = vrot.lane.b32.xlu0 %v73, 1
    %v395 = vpop.permute.xlu0 %394
    %396 = vrot.lane.b32.xlu0 %v75, 1
    %v397 = vpop.permute.xlu0 %396
    %398 = vrot.lane.b32.xlu0 %v77, 1
    %v399 = vpop.permute.xlu0 %398
    %400 = vrot.lane.b32.xlu0 %v79, 1
    %v401 = vpop.permute.xlu0 %400
    %402 = vrot.lane.b32.xlu0 %v81, 1
    %v403 = vpop.permute.xlu0 %402
    %404 = vrot.lane.b32.xlu0 %v83, 1
    %v405 = vpop.permute.xlu0 %404
    %406 = vrot.lane.b32.xlu0 %v85, 1
    %v407 = vpop.permute.xlu0 %406
    %408 = vrot.lane.b32.xlu0 %v87, 1
    %v409 = vpop.permute.xlu0 %408
    %410 = vrot.lane.b32.xlu0 %v89, 1
    %v411 = vpop.permute.xlu0 %410
    %476 = vrot.lane.b32.xlu0 %v91, 2
    %v477 = vpop.permute.xlu0 %476
    %478 = vrot.lane.b32.xlu0 %v93, 2
    %v479 = vpop.permute.xlu0 %478
    %480 = vrot.lane.b32.xlu0 %v95, 2
    %v481 = vpop.permute.xlu0 %480
    %482 = vrot.lane.b32.xlu0 %v97, 2
    %v483 = vpop.permute.xlu0 %482
    %484 = vrot.lane.b32.xlu0 %v99, 2
    %v485 = vpop.permute.xlu0 %484
    %486 = vrot.lane.b32.xlu0 %v101, 2
    %v487 = vpop.permute.xlu0 %486
    %488 = vrot.lane.b32.xlu0 %v103, 2
    %v489 = vpop.permute.xlu0 %488
    %490 = vrot.lane.b32.xlu0 %v105, 2
    %v491 = vpop.permute.xlu0 %490
    %492 = vrot.lane.b32.xlu0 %v107, 2
    %v493 = vpop.permute.xlu0 %492
    %494 = vrot.lane.b32.xlu0 %v109, 2
    %v495 = vpop.permute.xlu0 %494
    %496 = vrot.lane.b32.xlu0 %v111, 2
    %v497 = vpop.permute.xlu0 %496
    %498 = vrot.lane.b32.xlu0 %v113, 2
    %v499 = vpop.permute.xlu0 %498
    %500 = vrot.lane.b32.xlu0 %v115, 2
    %v501 = vpop.permute.xlu0 %500
    %502 = vrot.lane.b32.xlu0 %v117, 2
    %v503 = vpop.permute.xlu0 %502
    %504 = vrot.lane.b32.xlu0 %v119, 2
    %v505 = vpop.permute.xlu0 %504
    %506 = vrot.lane.b32.xlu0 %v121, 2
    %v507 = vpop.permute.xlu0 %506
    %508 = vrot.lane.b32.xlu0 %v123, 2
    %v509 = vpop.permute.xlu0 %508
    %510 = vrot.lane.b32.xlu0 %v125, 2
    %v511 = vpop.permute.xlu0 %510
    %512 = vrot.lane.b32.xlu0 %v127, 2
    %v513 = vpop.permute.xlu0 %512
    %514 = vrot.lane.b32.xlu0 %v129, 2
    %v515 = vpop.permute.xlu0 %514
    %516 = vrot.lane.b32.xlu0 %v131, 2
    %v517 = vpop.permute.xlu0 %516
    %518 = vrot.lane.b32.xlu0 %v133, 2
    %v519 = vpop.permute.xlu0 %518
    %520 = vrot.lane.b32.xlu0 %v135, 2
    %v521 = vpop.permute.xlu0 %520
    %522 = vrot.lane.b32.xlu0 %v137, 2
    %v523 = vpop.permute.xlu0 %522
    %524 = vrot.lane.b32.xlu0 %v139, 2
    %v525 = vpop.permute.xlu0 %524
    %526 = vrot.lane.b32.xlu0 %v141, 2
    %v527 = vpop.permute.xlu0 %526
    %528 = vrot.lane.b32.xlu0 %v143, 2
    %v529 = vpop.permute.xlu0 %528
    %530 = vrot.lane.b32.xlu0 %v145, 2
    %v531 = vpop.permute.xlu0 %530
    %532 = vrot.lane.b32.xlu0 %v147, 2
    %v533 = vpop.permute.xlu0 %532
    %534 = vrot.lane.b32.xlu0 %v149, 2
    %v535 = vpop.permute.xlu0 %534
    %536 = vrot.lane.b32.xlu0 %v151, 2
    %v537 = vpop.permute.xlu0 %536
    %538 = vrot.lane.b32.xlu0 %v153, 2
    %v539 = vpop.permute.xlu0 %538
    %vm572 = vcmask 7168
    %v573 = vsel %vm572, %v284, %v349
    %v574 = vsel %vm572, %v285, %v351
    %v575 = vsel %vm572, %v286, %v353
    %v576 = vsel %vm572, %v287, %v355
    %v577 = vsel %vm572, %v288, %v357
    %v578 = vsel %vm572, %v289, %v359
    %v579 = vsel %vm572, %v290, %v361
    %v580 = vsel %vm572, %v291, %v363
    %v581 = vsel %vm572, %v292, %v365
    %v582 = vsel %vm572, %v293, %v367
    %v583 = vsel %vm572, %v294, %v369
    %v584 = vsel %vm572, %v295, %v371
    %v585 = vsel %vm572, %v296, %v373
    %v586 = vsel %vm572, %v297, %v375
    %v587 = vsel %vm572, %v298, %v377
    %v588 = vsel %vm572, %v299, %v379
    %v589 = vsel %vm572, %v300, %v381
    %v590 = vsel %vm572, %v301, %v383
    %v591 = vsel %vm572, %v302, %v385
    %v592 = vsel %vm572, %v303, %v387
    %v593 = vsel %vm572, %v304, %v389
    %v594 = vsel %vm572, %v305, %v391
    %v595 = vsel %vm572, %v306, %v393
    %v596 = vsel %vm572, %v307, %v395
    %v597 = vsel %vm572, %v308, %v397
    %v598 = vsel %vm572, %v309, %v399
    %v599 = vsel %vm572, %v310, %v401
    %v600 = vsel %vm572, %v311, %v403
    %v601 = vsel %vm572, %v312, %v405
    %v602 = vsel %vm572, %v313, %v407
    %v603 = vsel %vm572, %v314, %v409
    %v604 = vsel %vm572, %v315, %v411
    %vm605 = vcmask 15360
    %v606 = vsel %vm605, %v573, %v477
    %v607 = vsel %vm605, %v574, %v479
    %v608 = vsel %vm605, %v575, %v481
    %v609 = vsel %vm605, %v576, %v483
    %v610 = vsel %vm605, %v577, %v485
    %v611 = vsel %vm605, %v578, %v487
    %v612 = vsel %vm605, %v579, %v489
    %v613 = vsel %vm605, %v580, %v491
    %v614 = vsel %vm605, %v581, %v493
    %v615 = vsel %vm605, %v582, %v495
    %v616 = vsel %vm605, %v583, %v497
    %v617 = vsel %vm605, %v584, %v499
    %v618 = vsel %vm605, %v585, %v501
    %v619 = vsel %vm605, %v586, %v503
    %v620 = vsel %vm605, %v587, %v505
    %v621 = vsel %vm605, %v588, %v507
    %v622 = vsel %vm605, %v589, %v509
    %v623 = vsel %vm605, %v590, %v511
    %v624 = vsel %vm605, %v591, %v513
    %v625 = vsel %vm605, %v592, %v515
    %v626 = vsel %vm605, %v593, %v517
    %v627 = vsel %vm605, %v594, %v519
    %v628 = vsel %vm605, %v595, %v521
    %v629 = vsel %vm605, %v596, %v523
    %v630 = vsel %vm605, %v597, %v525
    %v631 = vsel %vm605, %v598, %v527
    %v632 = vsel %vm605, %v599, %v529
    %v633 = vsel %vm605, %v600, %v531
    %v634 = vsel %vm605, %v601, %v533
    %v635 = vsel %vm605, %v602, %v535
    %v636 = vsel %vm605, %v603, %v537
    %v637 = vsel %vm605, %v604, %v539
    %v638 = vld [vmem:[%s1] sm:$0x7]
    %vm639 = vcmask 23552
    %v641 = vsel %vm639, %v606, 0
    %v644 = vsel %vm639, %v607, 0
    %v647 = vsel %vm639, %v608, 0
    %v650 = vsel %vm639, %v609, 0
    %v653 = vsel %vm639, %v610, 0
    %v656 = vsel %vm639, %v611, 0
    %v659 = vsel %vm639, %v612, 0
    %v662 = vsel %vm639, %v613, 0
    %v665 = vsel %vm639, %v614, 0
    %v668 = vsel %vm639, %v615, 0
    %v671 = vsel %vm639, %v616, 0
    %v674 = vsel %vm639, %v617, 0
    %v677 = vsel %vm639, %v618, 0
    %v680 = vsel %vm639, %v619, 0
    %v683 = vsel %vm639, %v620, 0
    %v686 = vsel %vm639, %v621, 0
    %v689 = vsel %vm639, %v622, 0
    %v692 = vsel %vm639, %v623, 0
    %v695 = vsel %vm639, %v624, 0
    %v698 = vsel %vm639, %v625, 0
    %v701 = vsel %vm639, %v626, 0
    %v704 = vsel %vm639, %v627, 0
    %v707 = vsel %vm639, %v628, 0
    %v710 = vsel %vm639, %v629, 0
    %v713 = vsel %vm639, %v630, 0
    %v716 = vsel %vm639, %v631, 0
    %v719 = vsel %vm639, %v632, 0
    %v722 = vsel %vm639, %v633, 0
    %v725 = vsel %vm639, %v634, 0
    %v728 = vsel %vm639, %v635, 0
    %v731 = vsel %vm639, %v636, 0
    %v734 = vsel %vm639, %v637, 0
    %vm736 = vcmask 1042432
    %v738 = vsel %vm736, %v638, 0
    %740 = vmatprep.subr.mxu0 0.0
    %741 = vmatpush1.msra.mxu0 %v738
    %742 = vmatprep.subr.mxu0 0.0
    %743 = vmatpush1.msra.mxu0 0.0
    %744 = vmatprep.subr.mxu0 0.0
    %745 = vmatpush1.msra.mxu0 0.0
    %746 = vmatprep.subr.mxu0 0.0
    %747 = vmatpush1.msra.mxu0 0.0
    %748 = vmatprep.subr.mxu0 0.0
    %749 = vmatpush1.msra.mxu0 0.0
    %750 = vmatprep.subr.mxu0 0.0
    %751 = vmatpush1.msra.mxu0 0.0
    %752 = vmatprep.subr.mxu0 0.0
    %753 = vmatpush1.msra.mxu0 0.0
    %754 = vmatprep.subr.mxu0 0.0
    %755 = vmatpush1.msra.mxu0 0.0
    %756 = vmatprep.subr.mxu0 0.0
    %757 = vmatpush1.msra.mxu0 0.0
    %758 = vmatprep.subr.mxu0 0.0
    %759 = vmatpush1.msra.mxu0 0.0
    %760 = vmatprep.subr.mxu0 0.0
    %761 = vmatpush1.msra.mxu0 0.0
    %762 = vmatprep.subr.mxu0 0.0
    %763 = vmatpush1.msra.mxu0 0.0
    %764 = vmatprep.subr.mxu0 0.0
    %765 = vmatpush1.msra.mxu0 0.0
    %766 = vmatprep.subr.mxu0 0.0
    %767 = vmatpush1.msra.mxu0 0.0
    %768 = vmatprep.subr.mxu0 0.0
    %769 = vmatpush1.msra.mxu0 0.0
    %770 = vmatprep.subr.mxu0 0.0
    %771 = vmatpush1.msra.mxu0 0.0
    %772 = vmatprep.subr.mxu0 0.0
    %773 = vmatpush1.msra.mxu0 0.0
    %774 = vmatprep.subr.mxu0 0.0
    %775 = vmatpush1.msra.mxu0 0.0
    %776 = vmatprep.subr.mxu0 0.0
    %777 = vmatpush1.msra.mxu0 0.0
    %778 = vmatprep.subr.mxu0 0.0
    %779 = vmatpush1.msra.mxu0 0.0
    %780 = vmatprep.subr.mxu0 0.0
    %781 = vmatpush1.msra.mxu0 0.0
    %782 = vmatprep.subr.mxu0 0.0
    %783 = vmatpush1.msra.mxu0 0.0
    %784 = vmatprep.subr.mxu0 0.0
    %785 = vmatpush1.msra.mxu0 0.0
    %786 = vmatprep.subr.mxu0 0.0
    %787 = vmatpush1.msra.mxu0 0.0
    %788 = vmatprep.subr.mxu0 0.0
    %789 = vmatpush1.msra.mxu0 0.0
    %790 = vmatprep.subr.mxu0 0.0
    %791 = vmatpush1.msra.mxu0 0.0
    %792 = vmatprep.subr.mxu0 0.0
    %793 = vmatpush1.msra.mxu0 0.0
    %794 = vmatprep.subr.mxu0 0.0
    %795 = vmatpush1.msra.mxu0 0.0
    %796 = vmatprep.subr.mxu0 0.0
    %797 = vmatpush1.msra.mxu0 0.0
    %798 = vmatprep.subr.mxu0 0.0
    %799 = vmatpush1.msra.mxu0 0.0
    %800 = vmatprep.subr.mxu0 0.0
    %801 = vmatpush1.msra.mxu0 0.0
    %802 = vmatprep.subr.mxu0 0.0
    %803 = vmatpush1.msra.mxu0 0.0
    %804 = vmatprep.mubr.f32.mxu0 0.0
    %805 = vmatmul.mubr.f32.gmra.mrb[0].mxu0 %v641
    %v806 = vpop.f32.mrb[0].mxu0
    %v807 = vadd.f32 0.0, %v806
    %v808 = vpop.f32.mrb[0].mxu0
    %809 = vmatprep.mubr.f32.mxu0 0.0
    %810 = vmatmul.mubr.f32.gmra.mrb[0].mxu0 %v644
    %v811 = vpop.f32.mrb[0].mxu0
    %v812 = vadd.f32 0.0, %v811
    %v813 = vpop.f32.mrb[0].mxu0
    %814 = vmatprep.mubr.f32.mxu0 0.0
    %815 = vmatmul.mubr.f32.gmra.mrb[0].mxu0 %v647
    %v816 = vpop.f32.mrb[0].mxu0
    %v817 = vadd.f32 0.0, %v816
    %v818 = vpop.f32.mrb[0].mxu0
    %819 = vmatprep.mubr.f32.mxu0 0.0
    %820 = vmatmul.mubr.f32.gmra.mrb[0].mxu0 %v650
    %v821 = vpop.f32.mrb[0].mxu0
    %v822 = vadd.f32 0.0, %v821
    %v823 = vpop.f32.mrb[0].mxu0
    %824 = vmatprep.mubr.f32.mxu0 0.0
    %825 = vmatmul.mubr.f32.gmra.mrb[0].mxu0 %v653
    %v826 = vpop.f32.mrb[0].mxu0
    %v827 = vadd.f32 0.0, %v826
    %v828 = vpop.f32.mrb[0].mxu0
    %829 = vmatprep.mubr.f32.mxu0 0.0
    %830 = vmatmul.mubr.f32.gmra.mrb[0].mxu0 %v656
    %v831 = vpop.f32.mrb[0].mxu0
    %v832 = vadd.f32 0.0, %v831
    %v833 = vpop.f32.mrb[0].mxu0
    %834 = vmatprep.mubr.f32.mxu0 0.0
    %835 = vmatmul.mubr.f32.gmra.mrb[0].mxu0 %v659
    %v836 = vpop.f32.mrb[0].mxu0
    %v837 = vadd.f32 0.0, %v836
    %v838 = vpop.f32.mrb[0].mxu0
    %839 = vmatprep.mubr.f32.mxu0 0.0
    %840 = vmatmul.mubr.f32.gmra.mrb[0].mxu0 %v662
    %v841 = vpop.f32.mrb[0].mxu0
    %v842 = vadd.f32 0.0, %v841
    %v843 = vpop.f32.mrb[0].mxu0
    %844 = vmatprep.mubr.f32.mxu0 0.0
    %845 = vmatmul.mubr.f32.gmra.mrb[0].mxu0 %v665
    %v846 = vpop.f32.mrb[0].mxu0
    %v847 = vadd.f32 0.0, %v846
    %v848 = vpop.f32.mrb[0].mxu0
    %849 = vmatprep.mubr.f32.mxu0 0.0
    %850 = vmatmul.mubr.f32.gmra.mrb[0].mxu0 %v668
    %v851 = vpop.f32.mrb[0].mxu0
    %v852 = vadd.f32 0.0, %v851
    %v853 = vpop.f32.mrb[0].mxu0
    %854 = vmatprep.mubr.f32.mxu0 0.0
    %855 = vmatmul.mubr.f32.gmra.mrb[0].mxu0 %v671
    %v856 = vpop.f32.mrb[0].mxu0
    %v857 = vadd.f32 0.0, %v856
    %v858 = vpop.f32.mrb[0].mxu0
    %859 = vmatprep.mubr.f32.mxu0 0.0
    %860 = vmatmul.mubr.f32.gmra.mrb[0].mxu0 %v674
    %v861 = vpop.f32.mrb[0].mxu0
    %v862 = vadd.f32 0.0, %v861
    %v863 = vpop.f32.mrb[0].mxu0
    %864 = vmatprep.mubr.f32.mxu0 0.0
    %865 = vmatmul.mubr.f32.gmra.mrb[0].mxu0 %v677
    %v866 = vpop.f32.mrb[0].mxu0
    %v867 = vadd.f32 0.0, %v866
    %v868 = vpop.f32.mrb[0].mxu0
    %869 = vmatprep.mubr.f32.mxu0 0.0
    %870 = vmatmul.mubr.f32.gmra.mrb[0].mxu0 %v680
    %v871 = vpop.f32.mrb[0].mxu0
    %v872 = vadd.f32 0.0, %v871
    %v873 = vpop.f32.mrb[0].mxu0
    %874 = vmatprep.mubr.f32.mxu0 0.0
    %875 = vmatmul.mubr.f32.gmra.mrb[0].mxu0 %v683
    %v876 = vpop.f32.mrb[0].mxu0
    %v877 = vadd.f32 0.0, %v876
    %v878 = vpop.f32.mrb[0].mxu0
    %879 = vmatprep.mubr.f32.mxu0 0.0
    %880 = vmatmul.mubr.f32.gmra.mrb[0].mxu0 %v686
    %v881 = vpop.f32.mrb[0].mxu0
    %v882 = vadd.f32 0.0, %v881
    %v883 = vpop.f32.mrb[0].mxu0
    %884 = vmatprep.mubr.f32.mxu0 0.0
    %885 = vmatmul.mubr.f32.gmra.mrb[0].mxu0 %v689
    %v886 = vpop.f32.mrb[0].mxu0
    %v887 = vadd.f32 0.0, %v886
    %v888 = vpop.f32.mrb[0].mxu0
    %889 = vmatprep.mubr.f32.mxu0 0.0
    %890 = vmatmul.mubr.f32.gmra.mrb[0].mxu0 %v692
    %v891 = vpop.f32.mrb[0].mxu0
    %v892 = vadd.f32 0.0, %v891
    %v893 = vpop.f32.mrb[0].mxu0
    %894 = vmatprep.mubr.f32.mxu0 0.0
    %895 = vmatmul.mubr.f32.gmra.mrb[0].mxu0 %v695
    %v896 = vpop.f32.mrb[0].mxu0
    %v897 = vadd.f32 0.0, %v896
    %v898 = vpop.f32.mrb[0].mxu0
    %899 = vmatprep.mubr.f32.mxu0 0.0
    %900 = vmatmul.mubr.f32.gmra.mrb[0].mxu0 %v698
    %v901 = vpop.f32.mrb[0].mxu0
    %v902 = vadd.f32 0.0, %v901
    %v903 = vpop.f32.mrb[0].mxu0
    %904 = vmatprep.mubr.f32.mxu0 0.0
    %905 = vmatmul.mubr.f32.gmra.mrb[0].mxu0 %v701
    %v906 = vpop.f32.mrb[0].mxu0
    %v907 = vadd.f32 0.0, %v906
    %v908 = vpop.f32.mrb[0].mxu0
    %909 = vmatprep.mubr.f32.mxu0 0.0
    %910 = vmatmul.mubr.f32.gmra.mrb[0].mxu0 %v704
    %v911 = vpop.f32.mrb[0].mxu0
    %v912 = vadd.f32 0.0, %v911
    %v913 = vpop.f32.mrb[0].mxu0
    %914 = vmatprep.mubr.f32.mxu0 0.0
    %915 = vmatmul.mubr.f32.gmra.mrb[0].mxu0 %v707
    %v916 = vpop.f32.mrb[0].mxu0
    %v917 = vadd.f32 0.0, %v916
    %v918 = vpop.f32.mrb[0].mxu0
    %919 = vmatprep.mubr.f32.mxu0 0.0
    %920 = vmatmul.mubr.f32.gmra.mrb[0].mxu0 %v710
    %v921 = vpop.f32.mrb[0].mxu0
    %v922 = vadd.f32 0.0, %v921
    %v923 = vpop.f32.mrb[0].mxu0
    %924 = vmatprep.mubr.f32.mxu0 0.0
    %925 = vmatmul.mubr.f32.gmra.mrb[0].mxu0 %v713
    %v926 = vpop.f32.mrb[0].mxu0
    %v927 = vadd.f32 0.0, %v926
    %v928 = vpop.f32.mrb[0].mxu0
    %929 = vmatprep.mubr.f32.mxu0 0.0
    %930 = vmatmul.mubr.f32.gmra.mrb[0].mxu0 %v716
    %v931 = vpop.f32.mrb[0].mxu0
    %v932 = vadd.f32 0.0, %v931
    %v933 = vpop.f32.mrb[0].mxu0
    %934 = vmatprep.mubr.f32.mxu0 0.0
    %935 = vmatmul.mubr.f32.gmra.mrb[0].mxu0 %v719
    %v936 = vpop.f32.mrb[0].mxu0
    %v937 = vadd.f32 0.0, %v936
    %v938 = vpop.f32.mrb[0].mxu0
    %939 = vmatprep.mubr.f32.mxu0 0.0
    %940 = vmatmul.mubr.f32.gmra.mrb[0].mxu0 %v722
    %v941 = vpop.f32.mrb[0].mxu0
    %v942 = vadd.f32 0.0, %v941
    %v943 = vpop.f32.mrb[0].mxu0
    %944 = vmatprep.mubr.f32.mxu0 0.0
    %945 = vmatmul.mubr.f32.gmra.mrb[0].mxu0 %v725
    %v946 = vpop.f32.mrb[0].mxu0
    %v947 = vadd.f32 0.0, %v946
    %v948 = vpop.f32.mrb[0].mxu0
    %949 = vmatprep.mubr.f32.mxu0 0.0
    %950 = vmatmul.mubr.f32.gmra.mrb[0].mxu0 %v728
    %v951 = vpop.f32.mrb[0].mxu0
    %v952 = vadd.f32 0.0, %v951
    %v953 = vpop.f32.mrb[0].mxu0
    %954 = vmatprep.mubr.f32.mxu0 0.0
    %955 = vmatmul.mubr.f32.gmra.mrb[0].mxu0 %v731
    %v956 = vpop.f32.mrb[0].mxu0
    %v957 = vadd.f32 0.0, %v956
    %v958 = vpop.f32.mrb[0].mxu0
    %959 = vmatprep.mubr.f32.mxu0 0.0
    %960 = vmatmul.mubr.f32.gmra.mrb[0].mxu0 %v734
    %v961 = vpop.f32.mrb[0].mxu0
    %v962 = vadd.f32 0.0, %v961
    %v963 = vpop.f32.mrb[0].mxu0
    %964 = vdwg.mxu0
    %vm965 = vcmask 261120
    %v966 = vsel %vm965, %v807, 0.0
    %v967 = vsel %vm965, %v812, 0.0
    %v968 = vadd.f32 %v966, %v967
    %v969 = vsel %vm965, %v817, 0.0
    %v970 = vadd.f32 %v968, %v969
    %v971 = vsel %vm965, %v822, 0.0
    %v972 = vadd.f32 %v970, %v971
    %v973 = vsel %vm965, %v827, 0.0
    %v974 = vadd.f32 %v972, %v973
    %v975 = vsel %vm965, %v832, 0.0
    %v976 = vadd.f32 %v974, %v975
    %v977 = vsel %vm965, %v837, 0.0
    %v978 = vadd.f32 %v976, %v977
    %v979 = vsel %vm965, %v842, 0.0
    %v980 = vadd.f32 %v978, %v979
    %v981 = vsel %vm965, %v847, 0.0
    %v982 = vadd.f32 %v980, %v981
    %v983 = vsel %vm965, %v852, 0.0
    %v984 = vadd.f32 %v982, %v983
    %v985 = vsel %vm965, %v857, 0.0
    %v986 = vadd.f32 %v984, %v985
    %v987 = vsel %vm965, %v862, 0.0
    %v988 = vadd.f32 %v986, %v987
    %v989 = vsel %vm965, %v867, 0.0
    %v990 = vadd.f32 %v988, %v989
    %v991 = vsel %vm965, %v872, 0.0
    %v992 = vadd.f32 %v990, %v991
    %v993 = vsel %vm965, %v877, 0.0
    %v994 = vadd.f32 %v992, %v993
    %v995 = vsel %vm965, %v882, 0.0
    %v996 = vadd.f32 %v994, %v995
    %v997 = vsel %vm965, %v887, 0.0
    %v998 = vadd.f32 %v996, %v997
    %v999 = vsel %vm965, %v892, 0.0
    %v1000 = vadd.f32 %v998, %v999
    %v1001 = vsel %vm965, %v897, 0.0
    %v1002 = vadd.f32 %v1000, %v1001
    %v1003 = vsel %vm965, %v902, 0.0
    %v1004 = vadd.f32 %v1002, %v1003
    %v1005 = vsel %vm965, %v907, 0.0
    %v1006 = vadd.f32 %v1004, %v1005
    %v1007 = vsel %vm965, %v912, 0.0
    %v1008 = vadd.f32 %v1006, %v1007
    %v1009 = vsel %vm965, %v917, 0.0
    %v1010 = vadd.f32 %v1008, %v1009
    %v1011 = vsel %vm965, %v922, 0.0
    %v1012 = vadd.f32 %v1010, %v1011
    %v1013 = vsel %vm965, %v927, 0.0
    %v1014 = vadd.f32 %v1012, %v1013
    %v1015 = vsel %vm965, %v932, 0.0
    %v1016 = vadd.f32 %v1014, %v1015
    %v1017 = vsel %vm965, %v937, 0.0
    %v1018 = vadd.f32 %v1016, %v1017
    %v1019 = vsel %vm965, %v942, 0.0
    %v1020 = vadd.f32 %v1018, %v1019
    %v1021 = vsel %vm965, %v947, 0.0
    %v1022 = vadd.f32 %v1020, %v1021
    %v1023 = vsel %vm965, %v952, 0.0
    %v1024 = vadd.f32 %v1022, %v1023
    %v1025 = vsel %vm965, %v957, 0.0
    %v1026 = vadd.f32 %v1024, %v1025
    %v1027 = vsel %vm965, %v962, 0.0
    %v1028 = vadd.f32 %v1026, %v1027
    %v1029 = vrot.slane %v1028, 4
    %v1030 = vadd.f32 %v1028, %v1029
    %v1031 = vrot.slane %v1030, 2
    %v1032 = vadd.f32 %v1030, %v1031
    %v1033 = vrot.slane %v1032, 1
    %v1034 = vadd.f32 %v1032, %v1033
    %v1035 = vrcp.pop 256.0
    %v1036 = vmul.f32 %v1034, %v1035
    %v1037 = vmul.f32 %v807, %v807
    %v1038 = vmul.f32 %v812, %v812
    %v1039 = vmul.f32 %v817, %v817
    %v1040 = vmul.f32 %v822, %v822
    %v1041 = vmul.f32 %v827, %v827
    %v1042 = vmul.f32 %v832, %v832
    %v1043 = vmul.f32 %v837, %v837
    %v1044 = vmul.f32 %v842, %v842
    %v1045 = vmul.f32 %v847, %v847
    %v1046 = vmul.f32 %v852, %v852
    %v1047 = vmul.f32 %v857, %v857
    %v1048 = vmul.f32 %v862, %v862
    %v1049 = vmul.f32 %v867, %v867
    %v1050 = vmul.f32 %v872, %v872
    %v1051 = vmul.f32 %v877, %v877
    %v1052 = vmul.f32 %v882, %v882
    %v1053 = vmul.f32 %v887, %v887
    %v1054 = vmul.f32 %v892, %v892
    %v1055 = vmul.f32 %v897, %v897
    %v1056 = vmul.f32 %v902, %v902
    %v1057 = vmul.f32 %v907, %v907
    %v1058 = vmul.f32 %v912, %v912
    %v1059 = vmul.f32 %v917, %v917
    %v1060 = vmul.f32 %v922, %v922
    %v1061 = vmul.f32 %v927, %v927
    %v1062 = vmul.f32 %v932, %v932
    %v1063 = vmul.f32 %v937, %v937
    %v1064 = vmul.f32 %v942, %v942
    %v1065 = vmul.f32 %v947, %v947
    %v1066 = vmul.f32 %v952, %v952
    %v1067 = vmul.f32 %v957, %v957
    %v1068 = vmul.f32 %v962, %v962
    %v1069 = vsel %vm965, %v1037, 0.0
    %v1070 = vsel %vm965, %v1038, 0.0
    %v1071 = vadd.f32 %v1069, %v1070
    %v1072 = vsel %vm965, %v1039, 0.0
    %v1073 = vadd.f32 %v1071, %v1072
    %v1074 = vsel %vm965, %v1040, 0.0
    %v1075 = vadd.f32 %v1073, %v1074
    %v1076 = vsel %vm965, %v1041, 0.0
    %v1077 = vadd.f32 %v1075, %v1076
    %v1078 = vsel %vm965, %v1042, 0.0
    %v1079 = vadd.f32 %v1077, %v1078
    %v1080 = vsel %vm965, %v1043, 0.0
    %v1081 = vadd.f32 %v1079, %v1080
    %v1082 = vsel %vm965, %v1044, 0.0
    %v1083 = vadd.f32 %v1081, %v1082
    %v1084 = vsel %vm965, %v1045, 0.0
    %v1085 = vadd.f32 %v1083, %v1084
    %v1086 = vsel %vm965, %v1046, 0.0
    %v1087 = vadd.f32 %v1085, %v1086
    %v1088 = vsel %vm965, %v1047, 0.0
    %v1089 = vadd.f32 %v1087, %v1088
    %v1090 = vsel %vm965, %v1048, 0.0
    %v1091 = vadd.f32 %v1089, %v1090
    %v1092 = vsel %vm965, %v1049, 0.0
    %v1093 = vadd.f32 %v1091, %v1092
    %v1094 = vsel %vm965, %v1050, 0.0
    %v1095 = vadd.f32 %v1093, %v1094
    %v1096 = vsel %vm965, %v1051, 0.0
    %v1097 = vadd.f32 %v1095, %v1096
    %v1098 = vsel %vm965, %v1052, 0.0
    %v1099 = vadd.f32 %v1097, %v1098
    %v1100 = vsel %vm965, %v1053, 0.0
    %v1101 = vadd.f32 %v1099, %v1100
    %v1102 = vsel %vm965, %v1054, 0.0
    %v1103 = vadd.f32 %v1101, %v1102
    %v1104 = vsel %vm965, %v1055, 0.0
    %v1105 = vadd.f32 %v1103, %v1104
    %v1106 = vsel %vm965, %v1056, 0.0
    %v1107 = vadd.f32 %v1105, %v1106
    %v1108 = vsel %vm965, %v1057, 0.0
    %v1109 = vadd.f32 %v1107, %v1108
    %v1110 = vsel %vm965, %v1058, 0.0
    %v1111 = vadd.f32 %v1109, %v1110
    %v1112 = vsel %vm965, %v1059, 0.0
    %v1113 = vadd.f32 %v1111, %v1112
    %v1114 = vsel %vm965, %v1060, 0.0
    %v1115 = vadd.f32 %v1113, %v1114
    %v1116 = vsel %vm965, %v1061, 0.0
    %v1117 = vadd.f32 %v1115, %v1116
    %v1118 = vsel %vm965, %v1062, 0.0
    %v1119 = vadd.f32 %v1117, %v1118
    %v1120 = vsel %vm965, %v1063, 0.0
    %v1121 = vadd.f32 %v1119, %v1120
    %v1122 = vsel %vm965, %v1064, 0.0
    %v1123 = vadd.f32 %v1121, %v1122
    %v1124 = vsel %vm965, %v1065, 0.0
    %v1125 = vadd.f32 %v1123, %v1124
    %v1126 = vsel %vm965, %v1066, 0.0
    %v1127 = vadd.f32 %v1125, %v1126
    %v1128 = vsel %vm965, %v1067, 0.0
    %v1129 = vadd.f32 %v1127, %v1128
    %v1130 = vsel %vm965, %v1068, 0.0
    %v1131 = vadd.f32 %v1129, %v1130
    %v1132 = vrot.slane %v1131, 4
    %v1133 = vadd.f32 %v1131, %v1132
    %v1134 = vrot.slane %v1133, 2
    %v1135 = vadd.f32 %v1133, %v1134
    %v1136 = vrot.slane %v1135, 1
    %v1137 = vadd.f32 %v1135, %v1136
    %v1138 = vmul.f32 %v1137, %v1035
    %v1139 = vmul.f32 %v1036, %v1036
    %v1140 = vsub.f32 %v1138, %v1139
    %v1141 = vmax.f32 %v1140, 0.0
    %v1142 = vld [vmem:[%s3] sm:$0x1]
    %v1143 = vadd.f32 %v1141, 1e-05
    %v1144 = vrsqrt.pop %v1143
    %v1145 = vmul.f32 %v1142, %v1144
    %v1146 = vld [vmem:[%s4] sm:$0x1]
    %v1147 = vmul.f32 %v1145, %v1036
    %v1148 = vsub.f32 %v1146, %v1147
    %v1149 = vlaneseq
    %v1150 = vshrl.u32 %v1149, 7
    %v1151 = vsub.s32 0, %v1150
    %v1152 = vrot.slane %v1145, %v1151
    %v1153 = vmul.f32 %v807, %v1152
    %v1154 = vmul.f32 %v812, %v1152
    %v1155 = vmul.f32 %v817, %v1152
    %v1156 = vmul.f32 %v822, %v1152
    %v1157 = vmul.f32 %v827, %v1152
    %v1158 = vmul.f32 %v832, %v1152
    %v1159 = vmul.f32 %v837, %v1152
    %v1160 = vmul.f32 %v842, %v1152
    %v1161 = vmul.f32 %v847, %v1152
    %v1162 = vmul.f32 %v852, %v1152
    %v1163 = vmul.f32 %v857, %v1152
    %v1164 = vmul.f32 %v862, %v1152
    %v1165 = vmul.f32 %v867, %v1152
    %v1166 = vmul.f32 %v872, %v1152
    %v1167 = vmul.f32 %v877, %v1152
    %v1168 = vmul.f32 %v882, %v1152
    %v1169 = vmul.f32 %v887, %v1152
    %v1170 = vmul.f32 %v892, %v1152
    %v1171 = vmul.f32 %v897, %v1152
    %v1172 = vmul.f32 %v902, %v1152
    %v1173 = vmul.f32 %v907, %v1152
    %v1174 = vmul.f32 %v912, %v1152
    %v1175 = vmul.f32 %v917, %v1152
    %v1176 = vmul.f32 %v922, %v1152
    %v1177 = vmul.f32 %v927, %v1152
    %v1178 = vmul.f32 %v932, %v1152
    %v1179 = vmul.f32 %v937, %v1152
    %v1180 = vmul.f32 %v942, %v1152
    %v1181 = vmul.f32 %v947, %v1152
    %v1182 = vmul.f32 %v952, %v1152
    %v1183 = vmul.f32 %v957, %v1152
    %v1184 = vmul.f32 %v962, %v1152
    %v1185 = vlaneseq
    %v1186 = vshrl.u32 %v1185, 7
    %v1187 = vsub.s32 0, %v1186
    %v1188 = vrot.slane %v1148, %v1187
    %v1189 = vadd.f32 %v1153, %v1188
    %v1190 = vadd.f32 %v1154, %v1188
    %v1191 = vadd.f32 %v1155, %v1188
    %v1192 = vadd.f32 %v1156, %v1188
    %v1193 = vadd.f32 %v1157, %v1188
    %v1194 = vadd.f32 %v1158, %v1188
    %v1195 = vadd.f32 %v1159, %v1188
    %v1196 = vadd.f32 %v1160, %v1188
    %v1197 = vadd.f32 %v1161, %v1188
    %v1198 = vadd.f32 %v1162, %v1188
    %v1199 = vadd.f32 %v1163, %v1188
    %v1200 = vadd.f32 %v1164, %v1188
    %v1201 = vadd.f32 %v1165, %v1188
    %v1202 = vadd.f32 %v1166, %v1188
    %v1203 = vadd.f32 %v1167, %v1188
    %v1204 = vadd.f32 %v1168, %v1188
    %v1205 = vadd.f32 %v1169, %v1188
    %v1206 = vadd.f32 %v1170, %v1188
    %v1207 = vadd.f32 %v1171, %v1188
    %v1208 = vadd.f32 %v1172, %v1188
    %v1209 = vadd.f32 %v1173, %v1188
    %v1210 = vadd.f32 %v1174, %v1188
    %v1211 = vadd.f32 %v1175, %v1188
    %v1212 = vadd.f32 %v1176, %v1188
    %v1213 = vadd.f32 %v1177, %v1188
    %v1214 = vadd.f32 %v1178, %v1188
    %v1215 = vadd.f32 %v1179, %v1188
    %v1216 = vadd.f32 %v1180, %v1188
    %v1217 = vadd.f32 %v1181, %v1188
    %v1218 = vadd.f32 %v1182, %v1188
    %v1219 = vadd.f32 %v1183, %v1188
    %v1220 = vadd.f32 %v1184, %v1188
    %v1221 = vmax.f32 %v1189, 0.0
    %v1222 = vmax.f32 %v1190, 0.0
    %v1223 = vmax.f32 %v1191, 0.0
    %v1224 = vmax.f32 %v1192, 0.0
    %v1225 = vmax.f32 %v1193, 0.0
    %v1226 = vmax.f32 %v1194, 0.0
    %v1227 = vmax.f32 %v1195, 0.0
    %v1228 = vmax.f32 %v1196, 0.0
    %v1229 = vmax.f32 %v1197, 0.0
    %v1230 = vmax.f32 %v1198, 0.0
    %v1231 = vmax.f32 %v1199, 0.0
    %v1232 = vmax.f32 %v1200, 0.0
    %v1233 = vmax.f32 %v1201, 0.0
    %v1234 = vmax.f32 %v1202, 0.0
    %v1235 = vmax.f32 %v1203, 0.0
    %v1236 = vmax.f32 %v1204, 0.0
    %v1237 = vmax.f32 %v1205, 0.0
    %v1238 = vmax.f32 %v1206, 0.0
    %v1239 = vmax.f32 %v1207, 0.0
    %v1240 = vmax.f32 %v1208, 0.0
    %v1241 = vmax.f32 %v1209, 0.0
    %v1242 = vmax.f32 %v1210, 0.0
    %v1243 = vmax.f32 %v1211, 0.0
    %v1244 = vmax.f32 %v1212, 0.0
    %v1245 = vmax.f32 %v1213, 0.0
    %v1246 = vmax.f32 %v1214, 0.0
    %v1247 = vmax.f32 %v1215, 0.0
    %v1248 = vmax.f32 %v1216, 0.0
    %v1249 = vmax.f32 %v1217, 0.0
    %v1250 = vmax.f32 %v1218, 0.0
    %v1251 = vmax.f32 %v1219, 0.0
    %v1252 = vmax.f32 %v1220, 0.0
    %1253 = vst.msk [vmem:[#allocation2] sm:$0xff] %vm965, %v1221
    %1254 = vst.msk [vmem:[#allocation2 + $0x8] sm:$0xff] %vm965, %v1222
    %1255 = vst.msk [vmem:[#allocation2 + $0x10] sm:$0xff] %vm965, %v1223
    %1256 = vst.msk [vmem:[#allocation2 + $0x18] sm:$0xff] %vm965, %v1224
    %1257 = vst.msk [vmem:[#allocation2 + $0x20] sm:$0xff] %vm965, %v1225
    %1258 = vst.msk [vmem:[#allocation2 + $0x28] sm:$0xff] %vm965, %v1226
    %1259 = vst.msk [vmem:[#allocation2 + $0x30] sm:$0xff] %vm965, %v1227
    %1260 = vst.msk [vmem:[#allocation2 + $0x38] sm:$0xff] %vm965, %v1228
    %1261 = vst.msk [vmem:[#allocation2 + $0x40] sm:$0xff] %vm965, %v1229
    %1262 = vst.msk [vmem:[#allocation2 + $0x48] sm:$0xff] %vm965, %v1230
    %1263 = vst.msk [vmem:[#allocation2 + $0x50] sm:$0xff] %vm965, %v1231
    %1264 = vst.msk [vmem:[#allocation2 + $0x58] sm:$0xff] %vm965, %v1232
    %1265 = vst.msk [vmem:[#allocation2 + $0x60] sm:$0xff] %vm965, %v1233
    %1266 = vst.msk [vmem:[#allocation2 + $0x68] sm:$0xff] %vm965, %v1234
    %1267 = vst.msk [vmem:[#allocation2 + $0x70] sm:$0xff] %vm965, %v1235
    %1268 = vst.msk [vmem:[#allocation2 + $0x78] sm:$0xff] %vm965, %v1236
    %1269 = vst.msk [vmem:[#allocation2 + $0x80] sm:$0xff] %vm965, %v1237
    %1270 = vst.msk [vmem:[#allocation2 + $0x88] sm:$0xff] %vm965, %v1238
    %1271 = vst.msk [vmem:[#allocation2 + $0x90] sm:$0xff] %vm965, %v1239
    %1272 = vst.msk [vmem:[#allocation2 + $0x98] sm:$0xff] %vm965, %v1240
    %1273 = vst.msk [vmem:[#allocation2 + $0xa0] sm:$0xff] %vm965, %v1241
    %1274 = vst.msk [vmem:[#allocation2 + $0xa8] sm:$0xff] %vm965, %v1242
    %1275 = vst.msk [vmem:[#allocation2 + $0xb0] sm:$0xff] %vm965, %v1243
    %1276 = vst.msk [vmem:[#allocation2 + $0xb8] sm:$0xff] %vm965, %v1244
    %1277 = vst.msk [vmem:[#allocation2 + $0xc0] sm:$0xff] %vm965, %v1245
    %1278 = vst.msk [vmem:[#allocation2 + $0xc8] sm:$0xff] %vm965, %v1246
    %1279 = vst.msk [vmem:[#allocation2 + $0xd0] sm:$0xff] %vm965, %v1247
    %1280 = vst.msk [vmem:[#allocation2 + $0xd8] sm:$0xff] %vm965, %v1248
    %1281 = vst.msk [vmem:[#allocation2 + $0xe0] sm:$0xff] %vm965, %v1249
    %1282 = vst.msk [vmem:[#allocation2 + $0xe8] sm:$0xff] %vm965, %v1250
    %1283 = vst.msk [vmem:[#allocation2 + $0xf0] sm:$0xff] %vm965, %v1251
    %1284 = vst.msk [vmem:[#allocation2 + $0xf8] sm:$0xff] %vm965, %v1252
    %v1285 = vld [vmem:[#allocation2] ss:$2 sm:$0xff]
    %s1286 = scalar_lea.vmem [#allocation2], 16
    %v1287 = vld [vmem:[%s1286] ss:$2 sm:$0xff]
    %s1288 = scalar_lea.vmem [#allocation2], 32
    %v1289 = vld [vmem:[%s1288] ss:$2 sm:$0xff]
    %s1290 = scalar_lea.vmem [#allocation2], 48
    %v1291 = vld [vmem:[%s1290] ss:$2 sm:$0xff]
    %s1292 = scalar_lea.vmem [#allocation2], 64
    %v1293 = vld [vmem:[%s1292] ss:$2 sm:$0xff]
    %s1294 = scalar_lea.vmem [#allocation2], 80
    %v1295 = vld [vmem:[%s1294] ss:$2 sm:$0xff]
    %s1296 = scalar_lea.vmem [#allocation2], 96
    %v1297 = vld [vmem:[%s1296] ss:$2 sm:$0xff]
    %s1298 = scalar_lea.vmem [#allocation2], 112
    %v1299 = vld [vmem:[%s1298] ss:$2 sm:$0xff]
    %s1300 = scalar_lea.vmem [#allocation2], 128
    %v1301 = vld [vmem:[%s1300] ss:$2 sm:$0xff]
    %s1302 = scalar_lea.vmem [#allocation2], 144
    %v1303 = vld [vmem:[%s1302] ss:$2 sm:$0xff]
    %s1304 = scalar_lea.vmem [#allocation2], 160
    %v1305 = vld [vmem:[%s1304] ss:$2 sm:$0xff]
    %s1306 = scalar_lea.vmem [#allocation2], 176
    %v1307 = vld [vmem:[%s1306] ss:$2 sm:$0xff]
    %s1308 = scalar_lea.vmem [#allocation2], 192
    %v1309 = vld [vmem:[%s1308] ss:$2 sm:$0xff]
    %s1310 = scalar_lea.vmem [#allocation2], 208
    %v1311 = vld [vmem:[%s1310] ss:$2 sm:$0xff]
    %s1312 = scalar_lea.vmem [#allocation2], 224
    %v1313 = vld [vmem:[%s1312] ss:$2 sm:$0xff]
    %s1314 = scalar_lea.vmem [#allocation2], 240
    %v1315 = vld [vmem:[%s1314] ss:$2 sm:$0xff]
    %s1316 = scalar_lea.vmem [#allocation2], 1
    %v1317 = vld [vmem:[%s1316] ss:$2 sm:$0xff]
    %s1318 = scalar_lea.vmem [#allocation2], 17
    %v1319 = vld [vmem:[%s1318] ss:$2 sm:$0xff]
    %s1320 = scalar_lea.vmem [#allocation2], 33
    %v1321 = vld [vmem:[%s1320] ss:$2 sm:$0xff]
    %s1322 = scalar_lea.vmem [#allocation2], 49
    %v1323 = vld [vmem:[%s1322] ss:$2 sm:$0xff]
    %s1324 = scalar_lea.vmem [#allocation2], 65
    %v1325 = vld [vmem:[%s1324] ss:$2 sm:$0xff]
    %s1326 = scalar_lea.vmem [#allocation2], 81
    %v1327 = vld [vmem:[%s1326] ss:$2 sm:$0xff]
    %s1328 = scalar_lea.vmem [#allocation2], 97
    %v1329 = vld [vmem:[%s1328] ss:$2 sm:$0xff]
    %s1330 = scalar_lea.vmem [#allocation2], 113
    %v1331 = vld [vmem:[%s1330] ss:$2 sm:$0xff]
    %s1332 = scalar_lea.vmem [#allocation2], 129
    %v1333 = vld [vmem:[%s1332] ss:$2 sm:$0xff]
    %s1334 = scalar_lea.vmem [#allocation2], 145
    %v1335 = vld [vmem:[%s1334] ss:$2 sm:$0xff]
    %s1336 = scalar_lea.vmem [#allocation2], 161
    %v1337 = vld [vmem:[%s1336] ss:$2 sm:$0xff]
    %s1338 = scalar_lea.vmem [#allocation2], 177
    %v1339 = vld [vmem:[%s1338] ss:$2 sm:$0xff]
    %s1340 = scalar_lea.vmem [#allocation2], 193
    %v1341 = vld [vmem:[%s1340] ss:$2 sm:$0xff]
    %s1342 = scalar_lea.vmem [#allocation2], 209
    %v1343 = vld [vmem:[%s1342] ss:$2 sm:$0xff]
    %s1344 = scalar_lea.vmem [#allocation2], 225
    %v1345 = vld [vmem:[%s1344] ss:$2 sm:$0xff]
    %s1346 = scalar_lea.vmem [#allocation2], 241
    %v1347 = vld [vmem:[%s1346] ss:$2 sm:$0xff]
    %v1348 = vrot.slane %v1317, 7
    %v1349 = vrot.slane %v1319, 7
    %v1350 = vrot.slane %v1321, 7
    %v1351 = vrot.slane %v1323, 7
    %v1352 = vrot.slane %v1325, 7
    %v1353 = vrot.slane %v1327, 7
    %v1354 = vrot.slane %v1329, 7
    %v1355 = vrot.slane %v1331, 7
    %v1356 = vrot.slane %v1333, 7
    %v1357 = vrot.slane %v1335, 7
    %v1358 = vrot.slane %v1337, 7
    %v1359 = vrot.slane %v1339, 7
    %v1360 = vrot.slane %v1341, 7
    %v1361 = vrot.slane %v1343, 7
    %v1362 = vrot.slane %v1345, 7
    %v1363 = vrot.slane %v1347, 7
    %v1364 = vsel %vm188, %v1362, %v1363
    %v1365 = vsel %vm188, %v1361, %v1362
    %v1366 = vsel %vm188, %v1360, %v1361
    %v1367 = vsel %vm188, %v1359, %v1360
    %v1368 = vsel %vm188, %v1358, %v1359
    %v1369 = vsel %vm188, %v1357, %v1358
    %v1370 = vsel %vm188, %v1356, %v1357
    %v1371 = vsel %vm188, %v1355, %v1356
    %v1372 = vsel %vm188, %v1354, %v1355
    %v1373 = vsel %vm188, %v1353, %v1354
    %v1374 = vsel %vm188, %v1352, %v1353
    %v1375 = vsel %vm188, %v1351, %v1352
    %v1376 = vsel %vm188, %v1350, %v1351
    %v1377 = vsel %vm188, %v1349, %v1350
    %v1378 = vsel %vm188, %v1348, %v1349
    %v1379 = vsel %vm188, %v1363, %v1348
    %v1380 = vsel %vm252, 0.0, %v1379
    %v1381 = vsel %vm253, 0.0, %v1378
    %v1382 = vsel %vm254, 0.0, %v1377
    %v1383 = vsel %vm255, 0.0, %v1376
    %v1384 = vsel %vm256, 0.0, %v1375
    %v1385 = vsel %vm257, 0.0, %v1374
    %v1386 = vsel %vm258, 0.0, %v1373
    %v1387 = vsel %vm259, 0.0, %v1372
    %v1388 = vsel %vm260, 0.0, %v1371
    %v1389 = vsel %vm261, 0.0, %v1370
    %v1390 = vsel %vm262, 0.0, %v1369
    %v1391 = vsel %vm263, 0.0, %v1368
    %v1392 = vsel %vm264, 0.0, %v1367
    %v1393 = vsel %vm265, 0.0, %v1366
    %v1394 = vsel %vm266, 0.0, %v1365
    %v1395 = vsel %vm267, 0.0, %v1364
    %1412 = vrot.lane.b32.xlu0 %v1285, 32
    %v1413 = vpop.permute.xlu0 %1412
    %1414 = vrot.lane.b32.xlu0 %v1287, 32
    %v1415 = vpop.permute.xlu0 %1414
    %1416 = vrot.lane.b32.xlu0 %v1289, 32
    %v1417 = vpop.permute.xlu0 %1416
    %1418 = vrot.lane.b32.xlu0 %v1291, 32
    %v1419 = vpop.permute.xlu0 %1418
    %1420 = vrot.lane.b32.xlu0 %v1293, 32
    %v1421 = vpop.permute.xlu0 %1420
    %1422 = vrot.lane.b32.xlu0 %v1295, 32
    %v1423 = vpop.permute.xlu0 %1422
    %1424 = vrot.lane.b32.xlu0 %v1297, 32
    %v1425 = vpop.permute.xlu0 %1424
    %1426 = vrot.lane.b32.xlu0 %v1299, 32
    %v1427 = vpop.permute.xlu0 %1426
    %1428 = vrot.lane.b32.xlu0 %v1301, 32
    %v1429 = vpop.permute.xlu0 %1428
    %1430 = vrot.lane.b32.xlu0 %v1303, 32
    %v1431 = vpop.permute.xlu0 %1430
    %1432 = vrot.lane.b32.xlu0 %v1305, 32
    %v1433 = vpop.permute.xlu0 %1432
    %1434 = vrot.lane.b32.xlu0 %v1307, 32
    %v1435 = vpop.permute.xlu0 %1434
    %1436 = vrot.lane.b32.xlu0 %v1309, 32
    %v1437 = vpop.permute.xlu0 %1436
    %1438 = vrot.lane.b32.xlu0 %v1311, 32
    %v1439 = vpop.permute.xlu0 %1438
    %1440 = vrot.lane.b32.xlu0 %v1313, 32
    %v1441 = vpop.permute.xlu0 %1440
    %1442 = vrot.lane.b32.xlu0 %v1315, 32
    %v1443 = vpop.permute.xlu0 %1442
    %1476 = vrot.lane.b32.xlu0 %v1317, 64
    %v1477 = vpop.permute.xlu0 %1476
    %1478 = vrot.lane.b32.xlu0 %v1319, 64
    %v1479 = vpop.permute.xlu0 %1478
    %1480 = vrot.lane.b32.xlu0 %v1321, 64
    %v1481 = vpop.permute.xlu0 %1480
    %1482 = vrot.lane.b32.xlu0 %v1323, 64
    %v1483 = vpop.permute.xlu0 %1482
    %1484 = vrot.lane.b32.xlu0 %v1325, 64
    %v1485 = vpop.permute.xlu0 %1484
    %1486 = vrot.lane.b32.xlu0 %v1327, 64
    %v1487 = vpop.permute.xlu0 %1486
    %1488 = vrot.lane.b32.xlu0 %v1329, 64
    %v1489 = vpop.permute.xlu0 %1488
    %1490 = vrot.lane.b32.xlu0 %v1331, 64
    %v1491 = vpop.permute.xlu0 %1490
    %1492 = vrot.lane.b32.xlu0 %v1333, 64
    %v1493 = vpop.permute.xlu0 %1492
    %1494 = vrot.lane.b32.xlu0 %v1335, 64
    %v1495 = vpop.permute.xlu0 %1494
    %1496 = vrot.lane.b32.xlu0 %v1337, 64
    %v1497 = vpop.permute.xlu0 %1496
    %1498 = vrot.lane.b32.xlu0 %v1339, 64
    %v1499 = vpop.permute.xlu0 %1498
    %1500 = vrot.lane.b32.xlu0 %v1341, 64
    %v1501 = vpop.permute.xlu0 %1500
    %1502 = vrot.lane.b32.xlu0 %v1343, 64
    %v1503 = vpop.permute.xlu0 %1502
    %1504 = vrot.lane.b32.xlu0 %v1345, 64
    %v1505 = vpop.permute.xlu0 %1504
    %1506 = vrot.lane.b32.xlu0 %v1347, 64
    %v1507 = vpop.permute.xlu0 %1506
    %v1524 = vsel %vm965, %v1380, %v1413
    %v1525 = vsel %vm965, %v1381, %v1415
    %v1526 = vsel %vm965, %v1382, %v1417
    %v1527 = vsel %vm965, %v1383, %v1419
    %v1528 = vsel %vm965, %v1384, %v1421
    %v1529 = vsel %vm965, %v1385, %v1423
    %v1530 = vsel %vm965, %v1386, %v1425
    %v1531 = vsel %vm965, %v1387, %v1427
    %v1532 = vsel %vm965, %v1388, %v1429
    %v1533 = vsel %vm965, %v1389, %v1431
    %v1534 = vsel %vm965, %v1390, %v1433
    %v1535 = vsel %vm965, %v1391, %v1435
    %v1536 = vsel %vm965, %v1392, %v1437
    %v1537 = vsel %vm965, %v1393, %v1439
    %v1538 = vsel %vm965, %v1394, %v1441
    %v1539 = vsel %vm965, %v1395, %v1443
    %vm1540 = vcmask 523264
    %v1541 = vsel %vm1540, %v1524, %v1477
    %v1542 = vsel %vm1540, %v1525, %v1479
    %v1543 = vsel %vm1540, %v1526, %v1481
    %v1544 = vsel %vm1540, %v1527, %v1483
    %v1545 = vsel %vm1540, %v1528, %v1485
    %v1546 = vsel %vm1540, %v1529, %v1487
    %v1547 = vsel %vm1540, %v1530, %v1489
    %v1548 = vsel %vm1540, %v1531, %v1491
    %v1549 = vsel %vm1540, %v1532, %v1493
    %v1550 = vsel %vm1540, %v1533, %v1495
    %v1551 = vsel %vm1540, %v1534, %v1497
    %v1552 = vsel %vm1540, %v1535, %v1499
    %v1553 = vsel %vm1540, %v1536, %v1501
    %v1554 = vsel %vm1540, %v1537, %v1503
    %v1555 = vsel %vm1540, %v1538, %v1505
    %v1556 = vsel %vm1540, %v1539, %v1507
    %v1557 = vld [vmem:[%s2] sm:$0xff]
    %v1558 = vld [vmem:[%s2 + $0x8] sm:$0xff]
    %v1559 = vld [vmem:[%s2 + $0x10] sm:$0xff]
    %v1560 = vld [vmem:[%s2 + $0x18] sm:$0xff]
    %v1561 = vld [vmem:[%s2 + $0x20] sm:$0xff]
    %v1562 = vld [vmem:[%s2 + $0x28] sm:$0xff]
    %v1563 = vld [vmem:[%s2 + $0x30] sm:$0xff]
    %v1564 = vld [vmem:[%s2 + $0x38] sm:$0xff]
    %v1565 = vld [vmem:[%s2 + $0x40] sm:$0xff]
    %v1566 = vld [vmem:[%s2 + $0x48] sm:$0xff]
    %v1567 = vld [vmem:[%s2 + $0x50] sm:$0xff]
    %v1568 = vld [vmem:[%s2 + $0x58] sm:$0xff]
    %vm1569 = vcmask 785408
    %v1571 = vsel %vm1569, %v1541, 0
    %v1574 = vsel %vm1569, %v1542, 0
    %v1577 = vsel %vm1569, %v1543, 0
    %v1580 = vsel %vm1569, %v1544, 0
    %v1583 = vsel %vm1569, %v1545, 0
    %v1586 = vsel %vm1569, %v1546, 0
    %v1589 = vsel %vm1569, %v1547, 0
    %v1592 = vsel %vm1569, %v1548, 0
    %v1595 = vsel %vm1569, %v1549, 0
    %v1598 = vsel %vm1569, %v1550, 0
    %v1601 = vsel %vm1569, %v1551, 0
    %v1604 = vsel %vm1569, %v1552, 0
    %v1607 = vsel %vm1569, %v1553, 0
    %v1610 = vsel %vm1569, %v1554, 0
    %v1613 = vsel %vm1569, %v1555, 0
    %v1616 = vsel %vm1569, %v1556, 0
    %1618 = vmatprep.subr.mxu0 0.0
    %1619 = vmatpush1.msra.mxu0 %v1557
    %1620 = vmatprep.subr.mxu0 0.0
    %1621 = vmatpush1.msra.mxu0 %v1558
    %1622 = vmatprep.subr.mxu0 0.0
    %1623 = vmatpush1.msra.mxu0 %v1559
    %1624 = vmatprep.subr.mxu0 0.0
    %1625 = vmatpush1.msra.mxu0 %v1560
    %1626 = vmatprep.subr.mxu0 0.0
    %1627 = vmatpush1.msra.mxu0 %v1561
    %1628 = vmatprep.subr.mxu0 0.0
    %1629 = vmatpush1.msra.mxu0 %v1562
    %1630 = vmatprep.subr.mxu0 0.0
    %1631 = vmatpush1.msra.mxu0 %v1563
    %1632 = vmatprep.subr.mxu0 0.0
    %1633 = vmatpush1.msra.mxu0 %v1564
    %1634 = vmatprep.subr.mxu0 0.0
    %1635 = vmatpush1.msra.mxu0 %v1565
    %1636 = vmatprep.subr.mxu0 0.0
    %1637 = vmatpush1.msra.mxu0 %v1566
    %1638 = vmatprep.subr.mxu0 0.0
    %1639 = vmatpush1.msra.mxu0 %v1567
    %1640 = vmatprep.subr.mxu0 0.0
    %1641 = vmatpush1.msra.mxu0 %v1568
    %1642 = vmatprep.subr.mxu0 0.0
    %1643 = vmatpush1.msra.mxu0 0.0
    %1644 = vmatprep.subr.mxu0 0.0
    %1645 = vmatpush1.msra.mxu0 0.0
    %1646 = vmatprep.subr.mxu0 0.0
    %1647 = vmatpush1.msra.mxu0 0.0
    %1648 = vmatprep.subr.mxu0 0.0
    %1649 = vmatpush1.msra.mxu0 0.0
    %1650 = vmatprep.subr.mxu0 0.0
    %1651 = vmatpush1.msra.mxu0 0.0
    %1652 = vmatprep.subr.mxu0 0.0
    %1653 = vmatpush1.msra.mxu0 0.0
    %1654 = vmatprep.subr.mxu0 0.0
    %1655 = vmatpush1.msra.mxu0 0.0
    %1656 = vmatprep.subr.mxu0 0.0
    %1657 = vmatpush1.msra.mxu0 0.0
    %1658 = vmatprep.subr.mxu0 0.0
    %1659 = vmatpush1.msra.mxu0 0.0
    %1660 = vmatprep.subr.mxu0 0.0
    %1661 = vmatpush1.msra.mxu0 0.0
    %1662 = vmatprep.subr.mxu0 0.0
    %1663 = vmatpush1.msra.mxu0 0.0
    %1664 = vmatprep.subr.mxu0 0.0
    %1665 = vmatpush1.msra.mxu0 0.0
    %1666 = vmatprep.subr.mxu0 0.0
    %1667 = vmatpush1.msra.mxu0 0.0
    %1668 = vmatprep.subr.mxu0 0.0
    %1669 = vmatpush1.msra.mxu0 0.0
    %1670 = vmatprep.subr.mxu0 0.0
    %1671 = vmatpush1.msra.mxu0 0.0
    %1672 = vmatprep.subr.mxu0 0.0
    %1673 = vmatpush1.msra.mxu0 0.0
    %1674 = vmatprep.subr.mxu0 0.0
    %1675 = vmatpush1.msra.mxu0 0.0
    %1676 = vmatprep.subr.mxu0 0.0
    %1677 = vmatpush1.msra.mxu0 0.0
    %1678 = vmatprep.subr.mxu0 0.0
    %1679 = vmatpush1.msra.mxu0 0.0
    %1680 = vmatprep.subr.mxu0 0.0
    %1681 = vmatpush1.msra.mxu0 0.0
    %1682 = vmatprep.mubr.f32.mxu0 0.0
    %1683 = vmatmul.mubr.f32.gmra.mrb[0].mxu0 %v1571
    %v1684 = vpop.f32.mrb[0].mxu0
    %v1685 = vadd.f32 0.0, %v1684
    %v1686 = vpop.f32.mrb[0].mxu0
    %1687 = vmatprep.mubr.f32.mxu0 0.0
    %1688 = vmatmul.mubr.f32.gmra.mrb[0].mxu0 %v1574
    %v1689 = vpop.f32.mrb[0].mxu0
    %v1690 = vadd.f32 0.0, %v1689
    %v1691 = vpop.f32.mrb[0].mxu0
    %1692 = vmatprep.mubr.f32.mxu0 0.0
    %1693 = vmatmul.mubr.f32.gmra.mrb[0].mxu0 %v1577
    %v1694 = vpop.f32.mrb[0].mxu0
    %v1695 = vadd.f32 0.0, %v1694
    %v1696 = vpop.f32.mrb[0].mxu0
    %1697 = vmatprep.mubr.f32.mxu0 0.0
    %1698 = vmatmul.mubr.f32.gmra.mrb[0].mxu0 %v1580
    %v1699 = vpop.f32.mrb[0].mxu0
    %v1700 = vadd.f32 0.0, %v1699
    %v1701 = vpop.f32.mrb[0].mxu0
    %1702 = vmatprep.mubr.f32.mxu0 0.0
    %1703 = vmatmul.mubr.f32.gmra.mrb[0].mxu0 %v1583
    %v1704 = vpop.f32.mrb[0].mxu0
    %v1705 = vadd.f32 0.0, %v1704
    %v1706 = vpop.f32.mrb[0].mxu0
    %1707 = vmatprep.mubr.f32.mxu0 0.0
    %1708 = vmatmul.mubr.f32.gmra.mrb[0].mxu0 %v1586
    %v1709 = vpop.f32.mrb[0].mxu0
    %v1710 = vadd.f32 0.0, %v1709
    %v1711 = vpop.f32.mrb[0].mxu0
    %1712 = vmatprep.mubr.f32.mxu0 0.0
    %1713 = vmatmul.mubr.f32.gmra.mrb[0].mxu0 %v1589
    %v1714 = vpop.f32.mrb[0].mxu0
    %v1715 = vadd.f32 0.0, %v1714
    %v1716 = vpop.f32.mrb[0].mxu0
    %1717 = vmatprep.mubr.f32.mxu0 0.0
    %1718 = vmatmul.mubr.f32.gmra.mrb[0].mxu0 %v1592
    %v1719 = vpop.f32.mrb[0].mxu0
    %v1720 = vadd.f32 0.0, %v1719
    %v1721 = vpop.f32.mrb[0].mxu0
    %1722 = vmatprep.mubr.f32.mxu0 0.0
    %1723 = vmatmul.mubr.f32.gmra.mrb[0].mxu0 %v1595
    %v1724 = vpop.f32.mrb[0].mxu0
    %v1725 = vadd.f32 0.0, %v1724
    %v1726 = vpop.f32.mrb[0].mxu0
    %1727 = vmatprep.mubr.f32.mxu0 0.0
    %1728 = vmatmul.mubr.f32.gmra.mrb[0].mxu0 %v1598
    %v1729 = vpop.f32.mrb[0].mxu0
    %v1730 = vadd.f32 0.0, %v1729
    %v1731 = vpop.f32.mrb[0].mxu0
    %1732 = vmatprep.mubr.f32.mxu0 0.0
    %1733 = vmatmul.mubr.f32.gmra.mrb[0].mxu0 %v1601
    %v1734 = vpop.f32.mrb[0].mxu0
    %v1735 = vadd.f32 0.0, %v1734
    %v1736 = vpop.f32.mrb[0].mxu0
    %1737 = vmatprep.mubr.f32.mxu0 0.0
    %1738 = vmatmul.mubr.f32.gmra.mrb[0].mxu0 %v1604
    %v1739 = vpop.f32.mrb[0].mxu0
    %v1740 = vadd.f32 0.0, %v1739
    %v1741 = vpop.f32.mrb[0].mxu0
    %1742 = vmatprep.mubr.f32.mxu0 0.0
    %1743 = vmatmul.mubr.f32.gmra.mrb[0].mxu0 %v1607
    %v1744 = vpop.f32.mrb[0].mxu0
    %v1745 = vadd.f32 0.0, %v1744
    %v1746 = vpop.f32.mrb[0].mxu0
    %1747 = vmatprep.mubr.f32.mxu0 0.0
    %1748 = vmatmul.mubr.f32.gmra.mrb[0].mxu0 %v1610
    %v1749 = vpop.f32.mrb[0].mxu0
    %v1750 = vadd.f32 0.0, %v1749
    %v1751 = vpop.f32.mrb[0].mxu0
    %1752 = vmatprep.mubr.f32.mxu0 0.0
    %1753 = vmatmul.mubr.f32.gmra.mrb[0].mxu0 %v1613
    %v1754 = vpop.f32.mrb[0].mxu0
    %v1755 = vadd.f32 0.0, %v1754
    %v1756 = vpop.f32.mrb[0].mxu0
    %1757 = vmatprep.mubr.f32.mxu0 0.0
    %1758 = vmatmul.mubr.f32.gmra.mrb[0].mxu0 %v1616
    %v1759 = vpop.f32.mrb[0].mxu0
    %v1760 = vadd.f32 0.0, %v1759
    %v1761 = vpop.f32.mrb[0].mxu0
    %1762 = vdwg.mxu0
    %v1763 = vsel %vm965, %v1685, 0.0
    %v1764 = vsel %vm965, %v1690, 0.0
    %v1765 = vadd.f32 %v1763, %v1764
    %v1766 = vsel %vm965, %v1695, 0.0
    %v1767 = vadd.f32 %v1765, %v1766
    %v1768 = vsel %vm965, %v1700, 0.0
    %v1769 = vadd.f32 %v1767, %v1768
    %v1770 = vsel %vm965, %v1705, 0.0
    %v1771 = vadd.f32 %v1769, %v1770
    %v1772 = vsel %vm965, %v1710, 0.0
    %v1773 = vadd.f32 %v1771, %v1772
    %v1774 = vsel %vm965, %v1715, 0.0
    %v1775 = vadd.f32 %v1773, %v1774
    %v1776 = vsel %vm965, %v1720, 0.0
    %v1777 = vadd.f32 %v1775, %v1776
    %v1778 = vsel %vm965, %v1725, 0.0
    %v1779 = vadd.f32 %v1777, %v1778
    %v1780 = vsel %vm965, %v1730, 0.0
    %v1781 = vadd.f32 %v1779, %v1780
    %v1782 = vsel %vm965, %v1735, 0.0
    %v1783 = vadd.f32 %v1781, %v1782
    %v1784 = vsel %vm965, %v1740, 0.0
    %v1785 = vadd.f32 %v1783, %v1784
    %v1786 = vsel %vm965, %v1745, 0.0
    %v1787 = vadd.f32 %v1785, %v1786
    %v1788 = vsel %vm965, %v1750, 0.0
    %v1789 = vadd.f32 %v1787, %v1788
    %v1790 = vsel %vm965, %v1755, 0.0
    %v1791 = vadd.f32 %v1789, %v1790
    %v1792 = vsel %vm965, %v1760, 0.0
    %v1793 = vadd.f32 %v1791, %v1792
    %v1794 = vrot.slane %v1793, 4
    %v1795 = vadd.f32 %v1793, %v1794
    %v1796 = vrot.slane %v1795, 2
    %v1797 = vadd.f32 %v1795, %v1796
    %v1798 = vrot.slane %v1797, 1
    %v1799 = vadd.f32 %v1797, %v1798
    %v1800 = vrcp.pop 128.0
    %v1801 = vmul.f32 %v1799, %v1800
    %v1802 = vmul.f32 %v1685, %v1685
    %v1803 = vmul.f32 %v1690, %v1690
    %v1804 = vmul.f32 %v1695, %v1695
    %v1805 = vmul.f32 %v1700, %v1700
    %v1806 = vmul.f32 %v1705, %v1705
    %v1807 = vmul.f32 %v1710, %v1710
    %v1808 = vmul.f32 %v1715, %v1715
    %v1809 = vmul.f32 %v1720, %v1720
    %v1810 = vmul.f32 %v1725, %v1725
    %v1811 = vmul.f32 %v1730, %v1730
    %v1812 = vmul.f32 %v1735, %v1735
    %v1813 = vmul.f32 %v1740, %v1740
    %v1814 = vmul.f32 %v1745, %v1745
    %v1815 = vmul.f32 %v1750, %v1750
    %v1816 = vmul.f32 %v1755, %v1755
    %v1817 = vmul.f32 %v1760, %v1760
    %v1818 = vsel %vm965, %v1802, 0.0
    %v1819 = vsel %vm965, %v1803, 0.0
    %v1820 = vadd.f32 %v1818, %v1819
    %v1821 = vsel %vm965, %v1804, 0.0
    %v1822 = vadd.f32 %v1820, %v1821
    %v1823 = vsel %vm965, %v1805, 0.0
    %v1824 = vadd.f32 %v1822, %v1823
    %v1825 = vsel %vm965, %v1806, 0.0
    %v1826 = vadd.f32 %v1824, %v1825
    %v1827 = vsel %vm965, %v1807, 0.0
    %v1828 = vadd.f32 %v1826, %v1827
    %v1829 = vsel %vm965, %v1808, 0.0
    %v1830 = vadd.f32 %v1828, %v1829
    %v1831 = vsel %vm965, %v1809, 0.0
    %v1832 = vadd.f32 %v1830, %v1831
    %v1833 = vsel %vm965, %v1810, 0.0
    %v1834 = vadd.f32 %v1832, %v1833
    %v1835 = vsel %vm965, %v1811, 0.0
    %v1836 = vadd.f32 %v1834, %v1835
    %v1837 = vsel %vm965, %v1812, 0.0
    %v1838 = vadd.f32 %v1836, %v1837
    %v1839 = vsel %vm965, %v1813, 0.0
    %v1840 = vadd.f32 %v1838, %v1839
    %v1841 = vsel %vm965, %v1814, 0.0
    %v1842 = vadd.f32 %v1840, %v1841
    %v1843 = vsel %vm965, %v1815, 0.0
    %v1844 = vadd.f32 %v1842, %v1843
    %v1845 = vsel %vm965, %v1816, 0.0
    %v1846 = vadd.f32 %v1844, %v1845
    %v1847 = vsel %vm965, %v1817, 0.0
    %v1848 = vadd.f32 %v1846, %v1847
    %v1849 = vrot.slane %v1848, 4
    %v1850 = vadd.f32 %v1848, %v1849
    %v1851 = vrot.slane %v1850, 2
    %v1852 = vadd.f32 %v1850, %v1851
    %v1853 = vrot.slane %v1852, 1
    %v1854 = vadd.f32 %v1852, %v1853
    %v1855 = vmul.f32 %v1854, %v1800
    %v1856 = vmul.f32 %v1801, %v1801
    %v1857 = vsub.f32 %v1855, %v1856
    %v1858 = vmax.f32 %v1857, 0.0
    %v1859 = vld [vmem:[%s3 + $0x1] sm:$0x1]
    %v1860 = vadd.f32 %v1858, 1e-05
    %v1861 = vrsqrt.pop %v1860
    %v1862 = vmul.f32 %v1859, %v1861
    %v1863 = vld [vmem:[%s4 + $0x1] sm:$0x1]
    %v1864 = vmul.f32 %v1862, %v1801
    %v1865 = vsub.f32 %v1863, %v1864
    %v1866 = vlaneseq
    %v1867 = vshrl.u32 %v1866, 7
    %v1868 = vsub.s32 0, %v1867
    %v1869 = vrot.slane %v1862, %v1868
    %v1870 = vmul.f32 %v1685, %v1869
    %v1871 = vmul.f32 %v1690, %v1869
    %v1872 = vmul.f32 %v1695, %v1869
    %v1873 = vmul.f32 %v1700, %v1869
    %v1874 = vmul.f32 %v1705, %v1869
    %v1875 = vmul.f32 %v1710, %v1869
    %v1876 = vmul.f32 %v1715, %v1869
    %v1877 = vmul.f32 %v1720, %v1869
    %v1878 = vmul.f32 %v1725, %v1869
    %v1879 = vmul.f32 %v1730, %v1869
    %v1880 = vmul.f32 %v1735, %v1869
    %v1881 = vmul.f32 %v1740, %v1869
    %v1882 = vmul.f32 %v1745, %v1869
    %v1883 = vmul.f32 %v1750, %v1869
    %v1884 = vmul.f32 %v1755, %v1869
    %v1885 = vmul.f32 %v1760, %v1869
    %v1886 = vlaneseq
    %v1887 = vshrl.u32 %v1886, 7
    %v1888 = vsub.s32 0, %v1887
    %v1889 = vrot.slane %v1865, %v1888
    %v1890 = vadd.f32 %v1870, %v1889
    %v1891 = vadd.f32 %v1871, %v1889
    %v1892 = vadd.f32 %v1872, %v1889
    %v1893 = vadd.f32 %v1873, %v1889
    %v1894 = vadd.f32 %v1874, %v1889
    %v1895 = vadd.f32 %v1875, %v1889
    %v1896 = vadd.f32 %v1876, %v1889
    %v1897 = vadd.f32 %v1877, %v1889
    %v1898 = vadd.f32 %v1878, %v1889
    %v1899 = vadd.f32 %v1879, %v1889
    %v1900 = vadd.f32 %v1880, %v1889
    %v1901 = vadd.f32 %v1881, %v1889
    %v1902 = vadd.f32 %v1882, %v1889
    %v1903 = vadd.f32 %v1883, %v1889
    %v1904 = vadd.f32 %v1884, %v1889
    %v1905 = vadd.f32 %v1885, %v1889
    %v1906 = vmax.f32 %v1890, 0.0
    %v1907 = vmax.f32 %v1891, 0.0
    %v1908 = vmax.f32 %v1892, 0.0
    %v1909 = vmax.f32 %v1893, 0.0
    %v1910 = vmax.f32 %v1894, 0.0
    %v1911 = vmax.f32 %v1895, 0.0
    %v1912 = vmax.f32 %v1896, 0.0
    %v1913 = vmax.f32 %v1897, 0.0
    %v1914 = vmax.f32 %v1898, 0.0
    %v1915 = vmax.f32 %v1899, 0.0
    %v1916 = vmax.f32 %v1900, 0.0
    %v1917 = vmax.f32 %v1901, 0.0
    %v1918 = vmax.f32 %v1902, 0.0
    %v1919 = vmax.f32 %v1903, 0.0
    %v1920 = vmax.f32 %v1904, 0.0
    %v1921 = vmax.f32 %v1905, 0.0
    %1922 = vst.msk [vmem:[#allocation3] sm:$0xff] %vm965, %v1906
    %1923 = vst.msk [vmem:[#allocation3 + $0x8] sm:$0xff] %vm965, %v1907
    %1924 = vst.msk [vmem:[#allocation3 + $0x10] sm:$0xff] %vm965, %v1908
    %1925 = vst.msk [vmem:[#allocation3 + $0x18] sm:$0xff] %vm965, %v1909
    %1926 = vst.msk [vmem:[#allocation3 + $0x20] sm:$0xff] %vm965, %v1910
    %1927 = vst.msk [vmem:[#allocation3 + $0x28] sm:$0xff] %vm965, %v1911
    %1928 = vst.msk [vmem:[#allocation3 + $0x30] sm:$0xff] %vm965, %v1912
    %1929 = vst.msk [vmem:[#allocation3 + $0x38] sm:$0xff] %vm965, %v1913
    %1930 = vst.msk [vmem:[#allocation3 + $0x40] sm:$0xff] %vm965, %v1914
    %1931 = vst.msk [vmem:[#allocation3 + $0x48] sm:$0xff] %vm965, %v1915
    %1932 = vst.msk [vmem:[#allocation3 + $0x50] sm:$0xff] %vm965, %v1916
    %1933 = vst.msk [vmem:[#allocation3 + $0x58] sm:$0xff] %vm965, %v1917
    %1934 = vst.msk [vmem:[#allocation3 + $0x60] sm:$0xff] %vm965, %v1918
    %1935 = vst.msk [vmem:[#allocation3 + $0x68] sm:$0xff] %vm965, %v1919
    %1936 = vst.msk [vmem:[#allocation3 + $0x70] sm:$0xff] %vm965, %v1920
    %1937 = vst.msk [vmem:[#allocation3 + $0x78] sm:$0xff] %vm965, %v1921
    %v1938 = vld [vmem:[#allocation3] ss:$2 sm:$0xff]
    %s1939 = scalar_lea.vmem [#allocation3], 16
    %v1940 = vld [vmem:[%s1939] ss:$2 sm:$0xff]
    %s1941 = scalar_lea.vmem [#allocation3], 32
    %v1942 = vld [vmem:[%s1941] ss:$2 sm:$0xff]
    %s1943 = scalar_lea.vmem [#allocation3], 48
    %v1944 = vld [vmem:[%s1943] ss:$2 sm:$0xff]
    %s1945 = scalar_lea.vmem [#allocation3], 64
    %v1946 = vld [vmem:[%s1945] ss:$2 sm:$0xff]
    %s1947 = scalar_lea.vmem [#allocation3], 80
    %v1948 = vld [vmem:[%s1947] ss:$2 sm:$0xff]
    %s1949 = scalar_lea.vmem [#allocation3], 96
    %v1950 = vld [vmem:[%s1949] ss:$2 sm:$0xff]
    %s1951 = scalar_lea.vmem [#allocation3], 112
    %v1952 = vld [vmem:[%s1951] ss:$2 sm:$0xff]
    %s1953 = scalar_lea.vmem [#allocation3], 1
    %v1954 = vld [vmem:[%s1953] ss:$2 sm:$0xff]
    %s1955 = scalar_lea.vmem [#allocation3], 17
    %v1956 = vld [vmem:[%s1955] ss:$2 sm:$0xff]
    %s1957 = scalar_lea.vmem [#allocation3], 33
    %v1958 = vld [vmem:[%s1957] ss:$2 sm:$0xff]
    %s1959 = scalar_lea.vmem [#allocation3], 49
    %v1960 = vld [vmem:[%s1959] ss:$2 sm:$0xff]
    %s1961 = scalar_lea.vmem [#allocation3], 65
    %v1962 = vld [vmem:[%s1961] ss:$2 sm:$0xff]
    %s1963 = scalar_lea.vmem [#allocation3], 81
    %v1964 = vld [vmem:[%s1963] ss:$2 sm:$0xff]
    %s1965 = scalar_lea.vmem [#allocation3], 97
    %v1966 = vld [vmem:[%s1965] ss:$2 sm:$0xff]
    %s1967 = scalar_lea.vmem [#allocation3], 113
    %v1968 = vld [vmem:[%s1967] ss:$2 sm:$0xff]
    %v1969 = vrot.slane %v1954, 7
    %v1970 = vrot.slane %v1956, 7
    %v1971 = vrot.slane %v1958, 7
    %v1972 = vrot.slane %v1960, 7
    %v1973 = vrot.slane %v1962, 7
    %v1974 = vrot.slane %v1964, 7
    %v1975 = vrot.slane %v1966, 7
    %v1976 = vrot.slane %v1968, 7
    %v1977 = vsel %vm188, %v1975, %v1976
    %v1978 = vsel %vm188, %v1974, %v1975
    %v1979 = vsel %vm188, %v1973, %v1974
    %v1980 = vsel %vm188, %v1972, %v1973
    %v1981 = vsel %vm188, %v1971, %v1972
    %v1982 = vsel %vm188, %v1970, %v1971
    %v1983 = vsel %vm188, %v1969, %v1970
    %v1984 = vsel %vm188, %v1976, %v1969
    %v1985 = vsel %vm252, 0.0, %v1984
    %v1986 = vsel %vm253, 0.0, %v1983
    %v1987 = vsel %vm254, 0.0, %v1982
    %v1988 = vsel %vm255, 0.0, %v1981
    %v1989 = vsel %vm256, 0.0, %v1980
    %v1990 = vsel %vm257, 0.0, %v1979
    %v1991 = vsel %vm258, 0.0, %v1978
    %v1992 = vsel %vm259, 0.0, %v1977
    %2001 = vrot.lane.b32.xlu0 %v1938, 32
    %v2002 = vpop.permute.xlu0 %2001
    %2003 = vrot.lane.b32.xlu0 %v1940, 32
    %v2004 = vpop.permute.xlu0 %2003
    %2005 = vrot.lane.b32.xlu0 %v1942, 32
    %v2006 = vpop.permute.xlu0 %2005
    %2007 = vrot.lane.b32.xlu0 %v1944, 32
    %v2008 = vpop.permute.xlu0 %2007
    %2009 = vrot.lane.b32.xlu0 %v1946, 32
    %v2010 = vpop.permute.xlu0 %2009
    %2011 = vrot.lane.b32.xlu0 %v1948, 32
    %v2012 = vpop.permute.xlu0 %2011
    %2013 = vrot.lane.b32.xlu0 %v1950, 32
    %v2014 = vpop.permute.xlu0 %2013
    %2015 = vrot.lane.b32.xlu0 %v1952, 32
    %v2016 = vpop.permute.xlu0 %2015
    %2033 = vrot.lane.b32.xlu0 %v1954, 64
    %v2034 = vpop.permute.xlu0 %2033
    %2035 = vrot.lane.b32.xlu0 %v1956, 64
    %v2036 = vpop.permute.xlu0 %2035
    %2037 = vrot.lane.b32.xlu0 %v1958, 64
    %v2038 = vpop.permute.xlu0 %2037
    %2039 = vrot.lane.b32.xlu0 %v1960, 64
    %v2040 = vpop.permute.xlu0 %2039
    %2041 = vrot.lane.b32.xlu0 %v1962, 64
    %v2042 = vpop.permute.xlu0 %2041
    %2043 = vrot.lane.b32.xlu0 %v1964, 64
    %v2044 = vpop.permute.xlu0 %2043
    %2045 = vrot.lane.b32.xlu0 %v1966, 64
    %v2046 = vpop.permute.xlu0 %2045
    %2047 = vrot.lane.b32.xlu0 %v1968, 64
    %v2048 = vpop.permute.xlu0 %2047
    %v2057 = vsel %vm965, %v1985, %v2002
    %v2058 = vsel %vm965, %v1986, %v2004
    %v2059 = vsel %vm965, %v1987, %v2006
    %v2060 = vsel %vm965, %v1988, %v2008
    %v2061 = vsel %vm965, %v1989, %v2010
    %v2062 = vsel %vm965, %v1990, %v2012
    %v2063 = vsel %vm965, %v1991, %v2014
    %v2064 = vsel %vm965, %v1992, %v2016
    %v2065 = vsel %vm1540, %v2057, %v2034
    %v2066 = vsel %vm1540, %v2058, %v2036
    %v2067 = vsel %vm1540, %v2059, %v2038
    %v2068 = vsel %vm1540, %v2060, %v2040
    %v2069 = vsel %vm1540, %v2061, %v2042
    %v2070 = vsel %vm1540, %v2062, %v2044
    %v2071 = vsel %vm1540, %v2063, %v2046
    %v2072 = vsel %vm1540, %v2064, %v2048
    %s2073 = scalar_lea.vmem %s2, 96
    %v2074 = vld [vmem:[%s2073] sm:$0xff]
    %v2075 = vld [vmem:[%s2073 + $0x8] sm:$0xff]
    %v2076 = vld [vmem:[%s2073 + $0x10] sm:$0xff]
    %v2077 = vld [vmem:[%s2073 + $0x18] sm:$0xff]
    %v2078 = vld [vmem:[%s2073 + $0x20] sm:$0xff]
    %v2079 = vld [vmem:[%s2073 + $0x28] sm:$0xff]
    %v2080 = vld [vmem:[%s2073 + $0x30] sm:$0xff]
    %v2081 = vld [vmem:[%s2073 + $0x38] sm:$0xff]
    %v2082 = vld [vmem:[%s2073 + $0x40] sm:$0xff]
    %v2083 = vld [vmem:[%s2073 + $0x48] sm:$0xff]
    %v2084 = vld [vmem:[%s2073 + $0x50] sm:$0xff]
    %v2085 = vld [vmem:[%s2073 + $0x58] sm:$0xff]
    %v2087 = vsel %vm1569, %v2065, 0
    %v2090 = vsel %vm1569, %v2066, 0
    %v2093 = vsel %vm1569, %v2067, 0
    %v2096 = vsel %vm1569, %v2068, 0
    %v2099 = vsel %vm1569, %v2069, 0
    %v2102 = vsel %vm1569, %v2070, 0
    %v2105 = vsel %vm1569, %v2071, 0
    %v2108 = vsel %vm1569, %v2072, 0
    %2110 = vmatprep.subr.mxu0 0.0
    %2111 = vmatpush1.msra.mxu0 %v2074
    %2112 = vmatprep.subr.mxu0 0.0
    %2113 = vmatpush1.msra.mxu0 %v2075
    %2114 = vmatprep.subr.mxu0 0.0
    %2115 = vmatpush1.msra.mxu0 %v2076
    %2116 = vmatprep.subr.mxu0 0.0
    %2117 = vmatpush1.msra.mxu0 %v2077
    %2118 = vmatprep.subr.mxu0 0.0
    %2119 = vmatpush1.msra.mxu0 %v2078
    %2120 = vmatprep.subr.mxu0 0.0
    %2121 = vmatpush1.msra.mxu0 %v2079
    %2122 = vmatprep.subr.mxu0 0.0
    %2123 = vmatpush1.msra.mxu0 %v2080
    %2124 = vmatprep.subr.mxu0 0.0
    %2125 = vmatpush1.msra.mxu0 %v2081
    %2126 = vmatprep.subr.mxu0 0.0
    %2127 = vmatpush1.msra.mxu0 %v2082
    %2128 = vmatprep.subr.mxu0 0.0
    %2129 = vmatpush1.msra.mxu0 %v2083
    %2130 = vmatprep.subr.mxu0 0.0
    %2131 = vmatpush1.msra.mxu0 %v2084
    %2132 = vmatprep.subr.mxu0 0.0
    %2133 = vmatpush1.msra.mxu0 %v2085
    %2134 = vmatprep.subr.mxu0 0.0
    %2135 = vmatpush1.msra.mxu0 0.0
    %2136 = vmatprep.subr.mxu0 0.0
    %2137 = vmatpush1.msra.mxu0 0.0
    %2138 = vmatprep.subr.mxu0 0.0
    %2139 = vmatpush1.msra.mxu0 0.0
    %2140 = vmatprep.subr.mxu0 0.0
    %2141 = vmatpush1.msra.mxu0 0.0
    %2142 = vmatprep.subr.mxu0 0.0
    %2143 = vmatpush1.msra.mxu0 0.0
    %2144 = vmatprep.subr.mxu0 0.0
    %2145 = vmatpush1.msra.mxu0 0.0
    %2146 = vmatprep.subr.mxu0 0.0
    %2147 = vmatpush1.msra.mxu0 0.0
    %2148 = vmatprep.subr.mxu0 0.0
    %2149 = vmatpush1.msra.mxu0 0.0
    %2150 = vmatprep.subr.mxu0 0.0
    %2151 = vmatpush1.msra.mxu0 0.0
    %2152 = vmatprep.subr.mxu0 0.0
    %2153 = vmatpush1.msra.mxu0 0.0
    %2154 = vmatprep.subr.mxu0 0.0
    %2155 = vmatpush1.msra.mxu0 0.0
    %2156 = vmatprep.subr.mxu0 0.0
    %2157 = vmatpush1.msra.mxu0 0.0
    %2158 = vmatprep.subr.mxu0 0.0
    %2159 = vmatpush1.msra.mxu0 0.0
    %2160 = vmatprep.subr.mxu0 0.0
    %2161 = vmatpush1.msra.mxu0 0.0
    %2162 = vmatprep.subr.mxu0 0.0
    %2163 = vmatpush1.msra.mxu0 0.0
    %2164 = vmatprep.subr.mxu0 0.0
    %2165 = vmatpush1.msra.mxu0 0.0
    %2166 = vmatprep.subr.mxu0 0.0
    %2167 = vmatpush1.msra.mxu0 0.0
    %2168 = vmatprep.subr.mxu0 0.0
    %2169 = vmatpush1.msra.mxu0 0.0
    %2170 = vmatprep.subr.mxu0 0.0
    %2171 = vmatpush1.msra.mxu0 0.0
    %2172 = vmatprep.subr.mxu0 0.0
    %2173 = vmatpush1.msra.mxu0 0.0
    %2174 = vmatprep.mubr.f32.mxu0 0.0
    %2175 = vmatmul.mubr.f32.gmra.mrb[0].mxu0 %v2087
    %v2176 = vpop.f32.mrb[0].mxu0
    %v2177 = vadd.f32 0.0, %v2176
    %v2178 = vpop.f32.mrb[0].mxu0
    %2179 = vmatprep.mubr.f32.mxu0 0.0
    %2180 = vmatmul.mubr.f32.gmra.mrb[0].mxu0 %v2090
    %v2181 = vpop.f32.mrb[0].mxu0
    %v2182 = vadd.f32 0.0, %v2181
    %v2183 = vpop.f32.mrb[0].mxu0
    %2184 = vmatprep.mubr.f32.mxu0 0.0
    %2185 = vmatmul.mubr.f32.gmra.mrb[0].mxu0 %v2093
    %v2186 = vpop.f32.mrb[0].mxu0
    %v2187 = vadd.f32 0.0, %v2186
    %v2188 = vpop.f32.mrb[0].mxu0
    %2189 = vmatprep.mubr.f32.mxu0 0.0
    %2190 = vmatmul.mubr.f32.gmra.mrb[0].mxu0 %v2096
    %v2191 = vpop.f32.mrb[0].mxu0
    %v2192 = vadd.f32 0.0, %v2191
    %v2193 = vpop.f32.mrb[0].mxu0
    %2194 = vmatprep.mubr.f32.mxu0 0.0
    %2195 = vmatmul.mubr.f32.gmra.mrb[0].mxu0 %v2099
    %v2196 = vpop.f32.mrb[0].mxu0
    %v2197 = vadd.f32 0.0, %v2196
    %v2198 = vpop.f32.mrb[0].mxu0
    %2199 = vmatprep.mubr.f32.mxu0 0.0
    %2200 = vmatmul.mubr.f32.gmra.mrb[0].mxu0 %v2102
    %v2201 = vpop.f32.mrb[0].mxu0
    %v2202 = vadd.f32 0.0, %v2201
    %v2203 = vpop.f32.mrb[0].mxu0
    %2204 = vmatprep.mubr.f32.mxu0 0.0
    %2205 = vmatmul.mubr.f32.gmra.mrb[0].mxu0 %v2105
    %v2206 = vpop.f32.mrb[0].mxu0
    %v2207 = vadd.f32 0.0, %v2206
    %v2208 = vpop.f32.mrb[0].mxu0
    %2209 = vmatprep.mubr.f32.mxu0 0.0
    %2210 = vmatmul.mubr.f32.gmra.mrb[0].mxu0 %v2108
    %v2211 = vpop.f32.mrb[0].mxu0
    %v2212 = vadd.f32 0.0, %v2211
    %v2213 = vpop.f32.mrb[0].mxu0
    %2214 = vdwg.mxu0
    %v2215 = vsel %vm965, %v2177, 0.0
    %v2216 = vsel %vm965, %v2182, 0.0
    %v2217 = vadd.f32 %v2215, %v2216
    %v2218 = vsel %vm965, %v2187, 0.0
    %v2219 = vadd.f32 %v2217, %v2218
    %v2220 = vsel %vm965, %v2192, 0.0
    %v2221 = vadd.f32 %v2219, %v2220
    %v2222 = vsel %vm965, %v2197, 0.0
    %v2223 = vadd.f32 %v2221, %v2222
    %v2224 = vsel %vm965, %v2202, 0.0
    %v2225 = vadd.f32 %v2223, %v2224
    %v2226 = vsel %vm965, %v2207, 0.0
    %v2227 = vadd.f32 %v2225, %v2226
    %v2228 = vsel %vm965, %v2212, 0.0
    %v2229 = vadd.f32 %v2227, %v2228
    %v2230 = vrot.slane %v2229, 4
    %v2231 = vadd.f32 %v2229, %v2230
    %v2232 = vrot.slane %v2231, 2
    %v2233 = vadd.f32 %v2231, %v2232
    %v2234 = vrot.slane %v2233, 1
    %v2235 = vadd.f32 %v2233, %v2234
    %v2236 = vrcp.pop 64.0
    %v2237 = vmul.f32 %v2235, %v2236
    %v2238 = vmul.f32 %v2177, %v2177
    %v2239 = vmul.f32 %v2182, %v2182
    %v2240 = vmul.f32 %v2187, %v2187
    %v2241 = vmul.f32 %v2192, %v2192
    %v2242 = vmul.f32 %v2197, %v2197
    %v2243 = vmul.f32 %v2202, %v2202
    %v2244 = vmul.f32 %v2207, %v2207
    %v2245 = vmul.f32 %v2212, %v2212
    %v2246 = vsel %vm965, %v2238, 0.0
    %v2247 = vsel %vm965, %v2239, 0.0
    %v2248 = vadd.f32 %v2246, %v2247
    %v2249 = vsel %vm965, %v2240, 0.0
    %v2250 = vadd.f32 %v2248, %v2249
    %v2251 = vsel %vm965, %v2241, 0.0
    %v2252 = vadd.f32 %v2250, %v2251
    %v2253 = vsel %vm965, %v2242, 0.0
    %v2254 = vadd.f32 %v2252, %v2253
    %v2255 = vsel %vm965, %v2243, 0.0
    %v2256 = vadd.f32 %v2254, %v2255
    %v2257 = vsel %vm965, %v2244, 0.0
    %v2258 = vadd.f32 %v2256, %v2257
    %v2259 = vsel %vm965, %v2245, 0.0
    %v2260 = vadd.f32 %v2258, %v2259
    %v2261 = vrot.slane %v2260, 4
    %v2262 = vadd.f32 %v2260, %v2261
    %v2263 = vrot.slane %v2262, 2
    %v2264 = vadd.f32 %v2262, %v2263
    %v2265 = vrot.slane %v2264, 1
    %v2266 = vadd.f32 %v2264, %v2265
    %v2267 = vmul.f32 %v2266, %v2236
    %v2268 = vmul.f32 %v2237, %v2237
    %v2269 = vsub.f32 %v2267, %v2268
    %v2270 = vmax.f32 %v2269, 0.0
    %v2271 = vld [vmem:[%s3 + $0x2] sm:$0x1]
    %v2272 = vadd.f32 %v2270, 1e-05
    %v2273 = vrsqrt.pop %v2272
    %v2274 = vmul.f32 %v2271, %v2273
    %v2275 = vld [vmem:[%s4 + $0x2] sm:$0x1]
    %v2276 = vmul.f32 %v2274, %v2237
    %v2277 = vsub.f32 %v2275, %v2276
    %v2278 = vlaneseq
    %v2279 = vshrl.u32 %v2278, 7
    %v2280 = vsub.s32 0, %v2279
    %v2281 = vrot.slane %v2274, %v2280
    %v2282 = vmul.f32 %v2177, %v2281
    %v2283 = vmul.f32 %v2182, %v2281
    %v2284 = vmul.f32 %v2187, %v2281
    %v2285 = vmul.f32 %v2192, %v2281
    %v2286 = vmul.f32 %v2197, %v2281
    %v2287 = vmul.f32 %v2202, %v2281
    %v2288 = vmul.f32 %v2207, %v2281
    %v2289 = vmul.f32 %v2212, %v2281
    %v2290 = vlaneseq
    %v2291 = vshrl.u32 %v2290, 7
    %v2292 = vsub.s32 0, %v2291
    %v2293 = vrot.slane %v2277, %v2292
    %v2294 = vadd.f32 %v2282, %v2293
    %v2295 = vadd.f32 %v2283, %v2293
    %v2296 = vadd.f32 %v2284, %v2293
    %v2297 = vadd.f32 %v2285, %v2293
    %v2298 = vadd.f32 %v2286, %v2293
    %v2299 = vadd.f32 %v2287, %v2293
    %v2300 = vadd.f32 %v2288, %v2293
    %v2301 = vadd.f32 %v2289, %v2293
    %v2302 = vmax.f32 %v2294, 0.0
    %v2303 = vmax.f32 %v2295, 0.0
    %v2304 = vmax.f32 %v2296, 0.0
    %v2305 = vmax.f32 %v2297, 0.0
    %v2306 = vmax.f32 %v2298, 0.0
    %v2307 = vmax.f32 %v2299, 0.0
    %v2308 = vmax.f32 %v2300, 0.0
    %v2309 = vmax.f32 %v2301, 0.0
    %2310 = vst.msk [vmem:[#allocation4] sm:$0xff] %vm965, %v2302
    %2311 = vst.msk [vmem:[#allocation4 + $0x8] sm:$0xff] %vm965, %v2303
    %2312 = vst.msk [vmem:[#allocation4 + $0x10] sm:$0xff] %vm965, %v2304
    %2313 = vst.msk [vmem:[#allocation4 + $0x18] sm:$0xff] %vm965, %v2305
    %2314 = vst.msk [vmem:[#allocation4 + $0x20] sm:$0xff] %vm965, %v2306
    %2315 = vst.msk [vmem:[#allocation4 + $0x28] sm:$0xff] %vm965, %v2307
    %2316 = vst.msk [vmem:[#allocation4 + $0x30] sm:$0xff] %vm965, %v2308
    %2317 = vst.msk [vmem:[#allocation4 + $0x38] sm:$0xff] %vm965, %v2309
    %v2318 = vld [vmem:[#allocation4] ss:$2 sm:$0xff]
    %s2319 = scalar_lea.vmem [#allocation4], 16
    %v2320 = vld [vmem:[%s2319] ss:$2 sm:$0xff]
    %s2321 = scalar_lea.vmem [#allocation4], 32
    %v2322 = vld [vmem:[%s2321] ss:$2 sm:$0xff]
    %s2323 = scalar_lea.vmem [#allocation4], 48
    %v2324 = vld [vmem:[%s2323] ss:$2 sm:$0xff]
    %s2325 = scalar_lea.vmem [#allocation4], 1
    %v2326 = vld [vmem:[%s2325] ss:$2 sm:$0xff]
    %s2327 = scalar_lea.vmem [#allocation4], 17
    %v2328 = vld [vmem:[%s2327] ss:$2 sm:$0xff]
    %s2329 = scalar_lea.vmem [#allocation4], 33
    %v2330 = vld [vmem:[%s2329] ss:$2 sm:$0xff]
    %s2331 = scalar_lea.vmem [#allocation4], 49
    %v2332 = vld [vmem:[%s2331] ss:$2 sm:$0xff]
    %v2333 = vrot.slane %v2326, 7
    %v2334 = vrot.slane %v2328, 7
    %v2335 = vrot.slane %v2330, 7
    %v2336 = vrot.slane %v2332, 7
    %v2337 = vsel %vm188, %v2335, %v2336
    %v2338 = vsel %vm188, %v2334, %v2335
    %v2339 = vsel %vm188, %v2333, %v2334
    %v2340 = vsel %vm188, %v2336, %v2333
    %v2341 = vsel %vm252, 0.0, %v2340
    %v2342 = vsel %vm253, 0.0, %v2339
    %v2343 = vsel %vm254, 0.0, %v2338
    %v2344 = vsel %vm255, 0.0, %v2337
    %2349 = vrot.lane.b32.xlu0 %v2318, 32
    %v2350 = vpop.permute.xlu0 %2349
    %2351 = vrot.lane.b32.xlu0 %v2320, 32
    %v2352 = vpop.permute.xlu0 %2351
    %2353 = vrot.lane.b32.xlu0 %v2322, 32
    %v2354 = vpop.permute.xlu0 %2353
    %2355 = vrot.lane.b32.xlu0 %v2324, 32
    %v2356 = vpop.permute.xlu0 %2355
    %2365 = vrot.lane.b32.xlu0 %v2326, 64
    %v2366 = vpop.permute.xlu0 %2365
    %2367 = vrot.lane.b32.xlu0 %v2328, 64
    %v2368 = vpop.permute.xlu0 %2367
    %2369 = vrot.lane.b32.xlu0 %v2330, 64
    %v2370 = vpop.permute.xlu0 %2369
    %2371 = vrot.lane.b32.xlu0 %v2332, 64
    %v2372 = vpop.permute.xlu0 %2371
    %v2377 = vsel %vm965, %v2341, %v2350
    %v2378 = vsel %vm965, %v2342, %v2352
    %v2379 = vsel %vm965, %v2343, %v2354
    %v2380 = vsel %vm965, %v2344, %v2356
    %v2381 = vsel %vm1540, %v2377, %v2366
    %v2382 = vsel %vm1540, %v2378, %v2368
    %v2383 = vsel %vm1540, %v2379, %v2370
    %v2384 = vsel %vm1540, %v2380, %v2372
    %s2385 = scalar_lea.vmem %s2, 192
    %v2386 = vld [vmem:[%s2385] sm:$0xff]
    %v2387 = vld [vmem:[%s2385 + $0x8] sm:$0xff]
    %v2388 = vld [vmem:[%s2385 + $0x10] sm:$0xff]
    %v2389 = vld [vmem:[%s2385 + $0x18] sm:$0xff]
    %v2390 = vld [vmem:[%s2385 + $0x20] sm:$0xff]
    %v2391 = vld [vmem:[%s2385 + $0x28] sm:$0xff]
    %v2392 = vld [vmem:[%s2385 + $0x30] sm:$0xff]
    %v2393 = vld [vmem:[%s2385 + $0x38] sm:$0xff]
    %v2394 = vld [vmem:[%s2385 + $0x40] sm:$0xff]
    %v2395 = vld [vmem:[%s2385 + $0x48] sm:$0xff]
    %v2396 = vld [vmem:[%s2385 + $0x50] sm:$0xff]
    %v2397 = vld [vmem:[%s2385 + $0x58] sm:$0xff]
    %v2399 = vsel %vm1569, %v2381, 0
    %v2402 = vsel %vm1569, %v2382, 0
    %v2405 = vsel %vm1569, %v2383, 0
    %v2408 = vsel %vm1569, %v2384, 0
    %2410 = vmatprep.subr.mxu0 0.0
    %2411 = vmatpush1.msra.mxu0 %v2386
    %2412 = vmatprep.subr.mxu0 0.0
    %2413 = vmatpush1.msra.mxu0 %v2387
    %2414 = vmatprep.subr.mxu0 0.0
    %2415 = vmatpush1.msra.mxu0 %v2388
    %2416 = vmatprep.subr.mxu0 0.0
    %2417 = vmatpush1.msra.mxu0 %v2389
    %2418 = vmatprep.subr.mxu0 0.0
    %2419 = vmatpush1.msra.mxu0 %v2390
    %2420 = vmatprep.subr.mxu0 0.0
    %2421 = vmatpush1.msra.mxu0 %v2391
    %2422 = vmatprep.subr.mxu0 0.0
    %2423 = vmatpush1.msra.mxu0 %v2392
    %2424 = vmatprep.subr.mxu0 0.0
    %2425 = vmatpush1.msra.mxu0 %v2393
    %2426 = vmatprep.subr.mxu0 0.0
    %2427 = vmatpush1.msra.mxu0 %v2394
    %2428 = vmatprep.subr.mxu0 0.0
    %2429 = vmatpush1.msra.mxu0 %v2395
    %2430 = vmatprep.subr.mxu0 0.0
    %2431 = vmatpush1.msra.mxu0 %v2396
    %2432 = vmatprep.subr.mxu0 0.0
    %2433 = vmatpush1.msra.mxu0 %v2397
    %2434 = vmatprep.subr.mxu0 0.0
    %2435 = vmatpush1.msra.mxu0 0.0
    %2436 = vmatprep.subr.mxu0 0.0
    %2437 = vmatpush1.msra.mxu0 0.0
    %2438 = vmatprep.subr.mxu0 0.0
    %2439 = vmatpush1.msra.mxu0 0.0
    %2440 = vmatprep.subr.mxu0 0.0
    %2441 = vmatpush1.msra.mxu0 0.0
    %2442 = vmatprep.subr.mxu0 0.0
    %2443 = vmatpush1.msra.mxu0 0.0
    %2444 = vmatprep.subr.mxu0 0.0
    %2445 = vmatpush1.msra.mxu0 0.0
    %2446 = vmatprep.subr.mxu0 0.0
    %2447 = vmatpush1.msra.mxu0 0.0
    %2448 = vmatprep.subr.mxu0 0.0
    %2449 = vmatpush1.msra.mxu0 0.0
    %2450 = vmatprep.subr.mxu0 0.0
    %2451 = vmatpush1.msra.mxu0 0.0
    %2452 = vmatprep.subr.mxu0 0.0
    %2453 = vmatpush1.msra.mxu0 0.0
    %2454 = vmatprep.subr.mxu0 0.0
    %2455 = vmatpush1.msra.mxu0 0.0
    %2456 = vmatprep.subr.mxu0 0.0
    %2457 = vmatpush1.msra.mxu0 0.0
    %2458 = vmatprep.subr.mxu0 0.0
    %2459 = vmatpush1.msra.mxu0 0.0
    %2460 = vmatprep.subr.mxu0 0.0
    %2461 = vmatpush1.msra.mxu0 0.0
    %2462 = vmatprep.subr.mxu0 0.0
    %2463 = vmatpush1.msra.mxu0 0.0
    %2464 = vmatprep.subr.mxu0 0.0
    %2465 = vmatpush1.msra.mxu0 0.0
    %2466 = vmatprep.subr.mxu0 0.0
    %2467 = vmatpush1.msra.mxu0 0.0
    %2468 = vmatprep.subr.mxu0 0.0
    %2469 = vmatpush1.msra.mxu0 0.0
    %2470 = vmatprep.subr.mxu0 0.0
    %2471 = vmatpush1.msra.mxu0 0.0
    %2472 = vmatprep.subr.mxu0 0.0
    %2473 = vmatpush1.msra.mxu0 0.0
    %2474 = vmatprep.mubr.f32.mxu0 0.0
    %2475 = vmatmul.mubr.f32.gmra.mrb[0].mxu0 %v2399
    %v2476 = vpop.f32.mrb[0].mxu0
    %v2477 = vadd.f32 0.0, %v2476
    %v2478 = vpop.f32.mrb[0].mxu0
    %2479 = vmatprep.mubr.f32.mxu0 0.0
    %2480 = vmatmul.mubr.f32.gmra.mrb[0].mxu0 %v2402
    %v2481 = vpop.f32.mrb[0].mxu0
    %v2482 = vadd.f32 0.0, %v2481
    %v2483 = vpop.f32.mrb[0].mxu0
    %2484 = vmatprep.mubr.f32.mxu0 0.0
    %2485 = vmatmul.mubr.f32.gmra.mrb[0].mxu0 %v2405
    %v2486 = vpop.f32.mrb[0].mxu0
    %v2487 = vadd.f32 0.0, %v2486
    %v2488 = vpop.f32.mrb[0].mxu0
    %2489 = vmatprep.mubr.f32.mxu0 0.0
    %2490 = vmatmul.mubr.f32.gmra.mrb[0].mxu0 %v2408
    %v2491 = vpop.f32.mrb[0].mxu0
    %v2492 = vadd.f32 0.0, %v2491
    %v2493 = vpop.f32.mrb[0].mxu0
    %2494 = vdwg.mxu0
    %v2495 = vsel %vm965, %v2477, 0.0
    %v2496 = vsel %vm965, %v2482, 0.0
    %v2497 = vadd.f32 %v2495, %v2496
    %v2498 = vsel %vm965, %v2487, 0.0
    %v2499 = vadd.f32 %v2497, %v2498
    %v2500 = vsel %vm965, %v2492, 0.0
    %v2501 = vadd.f32 %v2499, %v2500
    %v2502 = vrot.slane %v2501, 4
    %v2503 = vadd.f32 %v2501, %v2502
    %v2504 = vrot.slane %v2503, 2
    %v2505 = vadd.f32 %v2503, %v2504
    %v2506 = vrot.slane %v2505, 1
    %v2507 = vadd.f32 %v2505, %v2506
    %v2508 = vrcp.pop 32.0
    %v2509 = vmul.f32 %v2507, %v2508
    %v2510 = vmul.f32 %v2477, %v2477
    %v2511 = vmul.f32 %v2482, %v2482
    %v2512 = vmul.f32 %v2487, %v2487
    %v2513 = vmul.f32 %v2492, %v2492
    %v2514 = vsel %vm965, %v2510, 0.0
    %v2515 = vsel %vm965, %v2511, 0.0
    %v2516 = vadd.f32 %v2514, %v2515
    %v2517 = vsel %vm965, %v2512, 0.0
    %v2518 = vadd.f32 %v2516, %v2517
    %v2519 = vsel %vm965, %v2513, 0.0
    %v2520 = vadd.f32 %v2518, %v2519
    %v2521 = vrot.slane %v2520, 4
    %v2522 = vadd.f32 %v2520, %v2521
    %v2523 = vrot.slane %v2522, 2
    %v2524 = vadd.f32 %v2522, %v2523
    %v2525 = vrot.slane %v2524, 1
    %v2526 = vadd.f32 %v2524, %v2525
    %v2527 = vmul.f32 %v2526, %v2508
    %v2528 = vmul.f32 %v2509, %v2509
    %v2529 = vsub.f32 %v2527, %v2528
    %v2530 = vmax.f32 %v2529, 0.0
    %v2531 = vld [vmem:[%s3 + $0x3] sm:$0x1]
    %v2532 = vadd.f32 %v2530, 1e-05
    %v2533 = vrsqrt.pop %v2532
    %v2534 = vmul.f32 %v2531, %v2533
    %v2535 = vld [vmem:[%s4 + $0x3] sm:$0x1]
    %v2536 = vmul.f32 %v2534, %v2509
    %v2537 = vsub.f32 %v2535, %v2536
    %v2538 = vlaneseq
    %v2539 = vshrl.u32 %v2538, 7
    %v2540 = vsub.s32 0, %v2539
    %v2541 = vrot.slane %v2534, %v2540
    %v2542 = vmul.f32 %v2477, %v2541
    %v2543 = vmul.f32 %v2482, %v2541
    %v2544 = vmul.f32 %v2487, %v2541
    %v2545 = vmul.f32 %v2492, %v2541
    %v2546 = vlaneseq
    %v2547 = vshrl.u32 %v2546, 7
    %v2548 = vsub.s32 0, %v2547
    %v2549 = vrot.slane %v2537, %v2548
    %v2550 = vadd.f32 %v2542, %v2549
    %v2551 = vadd.f32 %v2543, %v2549
    %v2552 = vadd.f32 %v2544, %v2549
    %v2553 = vadd.f32 %v2545, %v2549
    %v2554 = vmax.f32 %v2550, 0.0
    %v2555 = vmax.f32 %v2551, 0.0
    %v2556 = vmax.f32 %v2552, 0.0
    %v2557 = vmax.f32 %v2553, 0.0
    %v2558 = vld [vmem:[%s5] sm:$0xff]
    %v2559 = vld [vmem:[%s6] sm:$0xff]
    %2561 = vset.pattern.permute.xlu0 0
    %2562 = vperm.xlu0 %2561, %v2559
    %v2563 = vpop.permute.xlu0 %2562
    %v2566 = vsel %vm965, %v2558, 0
    %2568 = vmatprep.subr.mxu0 0.0
    %2569 = vmatpush1.msra.mxu0 %v2554
    %2570 = vmatprep.subr.mxu0 0.0
    %2571 = vmatpush1.msra.mxu0 %v2555
    %2572 = vmatprep.subr.mxu0 0.0
    %2573 = vmatpush1.msra.mxu0 %v2556
    %2574 = vmatprep.subr.mxu0 0.0
    %2575 = vmatpush1.msra.mxu0 %v2557
    %2576 = vmatprep.subr.mxu0 0.0
    %2577 = vmatpush1.msra.mxu0 0.0
    %2578 = vmatprep.subr.mxu0 0.0
    %2579 = vmatpush1.msra.mxu0 0.0
    %2580 = vmatprep.subr.mxu0 0.0
    %2581 = vmatpush1.msra.mxu0 0.0
    %2582 = vmatprep.subr.mxu0 0.0
    %2583 = vmatpush1.msra.mxu0 0.0
    %2584 = vmatprep.subr.mxu0 0.0
    %2585 = vmatpush1.msra.mxu0 0.0
    %2586 = vmatprep.subr.mxu0 0.0
    %2587 = vmatpush1.msra.mxu0 0.0
    %2588 = vmatprep.subr.mxu0 0.0
    %2589 = vmatpush1.msra.mxu0 0.0
    %2590 = vmatprep.subr.mxu0 0.0
    %2591 = vmatpush1.msra.mxu0 0.0
    %2592 = vmatprep.subr.mxu0 0.0
    %2593 = vmatpush1.msra.mxu0 0.0
    %2594 = vmatprep.subr.mxu0 0.0
    %2595 = vmatpush1.msra.mxu0 0.0
    %2596 = vmatprep.subr.mxu0 0.0
    %2597 = vmatpush1.msra.mxu0 0.0
    %2598 = vmatprep.subr.mxu0 0.0
    %2599 = vmatpush1.msra.mxu0 0.0
    %2600 = vmatprep.subr.mxu0 0.0
    %2601 = vmatpush1.msra.mxu0 0.0
    %2602 = vmatprep.subr.mxu0 0.0
    %2603 = vmatpush1.msra.mxu0 0.0
    %2604 = vmatprep.subr.mxu0 0.0
    %2605 = vmatpush1.msra.mxu0 0.0
    %2606 = vmatprep.subr.mxu0 0.0
    %2607 = vmatpush1.msra.mxu0 0.0
    %2608 = vmatprep.subr.mxu0 0.0
    %2609 = vmatpush1.msra.mxu0 0.0
    %2610 = vmatprep.subr.mxu0 0.0
    %2611 = vmatpush1.msra.mxu0 0.0
    %2612 = vmatprep.subr.mxu0 0.0
    %2613 = vmatpush1.msra.mxu0 0.0
    %2614 = vmatprep.subr.mxu0 0.0
    %2615 = vmatpush1.msra.mxu0 0.0
    %2616 = vmatprep.subr.mxu0 0.0
    %2617 = vmatpush1.msra.mxu0 0.0
    %2618 = vmatprep.subr.mxu0 0.0
    %2619 = vmatpush1.msra.mxu0 0.0
    %2620 = vmatprep.subr.mxu0 0.0
    %2621 = vmatpush1.msra.mxu0 0.0
    %2622 = vmatprep.subr.mxu0 0.0
    %2623 = vmatpush1.msra.mxu0 0.0
    %2624 = vmatprep.subr.mxu0 0.0
    %2625 = vmatpush1.msra.mxu0 0.0
    %2626 = vmatprep.subr.mxu0 0.0
    %2627 = vmatpush1.msra.mxu0 0.0
    %2628 = vmatprep.subr.mxu0 0.0
    %2629 = vmatpush1.msra.mxu0 0.0
    %2630 = vmatprep.subr.mxu0 0.0
    %2631 = vmatpush1.msra.mxu0 0.0
    %2632 = vmatprep.mubr.f32.mxu0 0.0
    %2633 = vmatmul.mubr.f32.gmra.mrb[0].mxu0 %v2566
    %v2634 = vpop.f32.mrb[0].mxu0
    %v2635 = vadd.f32 %v2563, %v2634
    %v2636 = vpop.f32.mrb[0].mxu0
    %2637 = vdwg.mxu0
    %2638 = vst.msk [vmem:[#allocation5] sm:$0xff] %vm965, %v2635
    // Predicated region
    $region30: #{forward.1} parent=1 // pred_check
      _
    $region31: #{forward.1} parent=1 // pred_check_branch
      %2640 = sbr.rel (0) target = $region33
    $region32: #{forward.1} parent=1 // pred_region
      %s2642 = ssub.s32 128, 128
      %2643 = vsyncadd [#allocation6], %s2642
      %s2645 = sshll.u32 [#allocation5], 4
      %s2646 = int_to_ptr.vmem [resolvable:$true] %s2645
      %2648 = dma.vmem_to_hbm [thread:$0]  %s2646, 128, %s7, [#allocation6]
    $region33: #{forward.1} parent=1 // pred_fallthru
      _
    // Predicated region
    $region34: #{forward.1} parent=1 // pred_check
      _
    $region35: #{forward.1} parent=1 // pred_check_branch
      %2650 = sbr.rel (0) target = $region37
    $region36: #{forward.1} parent=1 // pred_region
      %2651 = dma.done [#allocation6], 128
    $region37: #{forward.1} parent=1 // pred_fallthru
      _
    %2652 = vsyncpa [#allocation6], 1

</llo_original>
